<compile_context>
chip_gen: v7x
topology: tpu7x:2x2x1
jax: 0.10.0
libtpu: 0.0.40
codegen_flags: <defaults>
</compile_context>

<pallas_src>
import functools

import numpy as np
import jax
import jax.numpy as jnp
from jax.experimental import pallas as pl
from jax.experimental.pallas import tpu as pltpu

LN_EPS = 1e-5


def _softmax_axis0(p):
    # softmax over the leading (sublane) axis == torch softmax(dim=1) on (B, T, T)
    m = jnp.max(p, axis=0, keepdims=True)
    e = jnp.exp(p - m)
    return e * pl.reciprocal(jnp.sum(e, axis=0, keepdims=True), approx=True)


def _softmax_axis1(p):
    # softmax over the trailing (lane) axis
    m = jnp.max(p, axis=1, keepdims=True)
    e = jnp.exp(p - m)
    return e * pl.reciprocal(jnp.sum(e, axis=1, keepdims=True), approx=True)


def _astgcn_block_kernel(xc_ref, u1blk_ref, u2_ref, w1_ref, repmt_ref, repm_ref,
                         selm_ref, w2_ref, chebt_ref, xcops_ref, tconv_ref, trb_ref,
                         gamma_ref, beta_ref, avg_ref, out_ref, gcn_scr,
                         *, b_blk, n_nodes, n_t, f_chev, f_time, k_cheb):
    # xc_ref:    (1, b_blk*N, T*F_in)   rows = (batch-in-block, node), cols = (t, f)
    # u1blk_ref: (b_blk, b_blk*N)       block-diagonal U1 rows
    # xcops_ref: (T*F_in, T*F_time + K*T*F_chev + 2T)  = [rwb | theta_0.. | u3e | w3e]
    # tconv_ref: (T*F_chev, T*F_time)   banded 1x3 time-conv operator
    # avg_ref:   (T*F_time, T*F_time)   block-diagonal channel-averaging operator (f32)
    # out_ref:   (1, b_blk*N, T*F_time)
    f32 = jnp.float32
    N, T, K = n_nodes, n_t, k_cheb
    tfc = T * f_chev
    tft = T * f_time

    xc = xc_ref[0]                                             # (b_blk*N, T*F_in)

    # ---- one fused matmul for every shared-weight xc-side contraction --------------
    # columns: [ residual (T*F_time) | x@theta_k, k=0..K-1 | U3-proj (T) | W3-proj (T) ]
    big = jnp.dot(xc, xcops_ref[...], preferred_element_type=f32)
    res = big[:, :tft]                                         # residual 1x1 conv (no bias)
    p_off = tft + K * tfc
    rhs_t_all = big[:, p_off:p_off + T]                        # (b_blk*N, T) U3 projection
    w3x_all = big[:, p_off + T:p_off + 2 * T]                  # (b_blk*N, T) W3 projection

    # per-batch U1 contraction over the stacked rows (one matmul for all folded batches)
    u1all = jnp.dot(u1blk_ref[...], xc, preferred_element_type=f32)   # (b_blk, T*F_in)

    for b in range(b_blk):                                     # unrolled at trace time
        r0 = b * N
        xc_b = xc[r0:r0 + N, :]
        rhs_t_b = rhs_t_all[r0:r0 + N, :]                      # (N, T)
        w3x_b = w3x_all[r0:r0 + N, :]                          # (N, T)

        # ---- temporal attention E (T, T); softmax over rows (torch dim=1) -----------
        # a_mat[t, f] = sum_n U1[n] * x[b, n, f, t]   (row-broadcast trick, no reshape)
        u1row = u1all[b:b + 1, :]                              # (1, T*F_in)
        a_mat = jnp.dot(repmt_ref[...] * u1row, selm_ref[...],
                        preferred_element_type=f32)            # (T, F_in)
        m2 = jnp.dot(u2_ref[...], rhs_t_b, preferred_element_type=f32)    # (F_in, T)
        e_att = _softmax_axis0(jnp.dot(a_mat, m2, preferred_element_type=f32))

        # ---- spatial attention, produced directly as S^T (no (N, N) transpose) ------
        ew1 = jnp.dot(e_att, w1_ref[...], preferred_element_type=f32)       # (T, 1)
        ew1_rep = jnp.dot(repm_ref[...], ew1, preferred_element_type=f32)   # (T*F_in, 1)
        lhs1 = jnp.dot(xc_b, selm_ref[...] * ew1_rep,
                       preferred_element_type=f32)                          # (N, F_in)
        lhs_s = jnp.dot(lhs1, w2_ref[...], preferred_element_type=f32)      # (N, T)
        rhs_s = jnp.dot(w3x_b, e_att, preferred_element_type=f32)           # (N, T)
        prod_st = jax.lax.dot_general(rhs_s, lhs_s, (((1,), (1,)), ((), ())),
                                      preferred_element_type=f32)           # product^T
        s_t = _softmax_axis1(prod_st)                                       # = S^T (N, N)

        # ---- K-order Chebyshev conv; theta_k already applied to x inside `big` ------
        acc = jnp.dot(chebt_ref[0] * s_t, big[r0:r0 + N, tft:tft + tfc],
                      preferred_element_type=f32)
        for k in range(1, K):
            xth_k = big[r0:r0 + N, tft + k * tfc:tft + (k + 1) * tfc]
            acc = acc + jnp.dot(chebt_ref[k] * s_t, xth_k, preferred_element_type=f32)
        gcn_scr[r0:r0 + N, :] = jnp.maximum(acc, 0.0)

    # ---- stacked 1x3 time conv + residual + ReLU (over all folded batches at once) --
    gcn = gcn_scr[...]                                         # (b_blk*N, T*F_chev) f32
    tc = jnp.dot(gcn.astype(tconv_ref.dtype), tconv_ref[...], preferred_element_type=f32)
    comb = jnp.maximum(tc + res + trb_ref[...], 0.0)           # (b_blk*N, T*F_time)

    # ---- segmented LayerNorm: var = E[x^2] - mean^2 (two independent block means) ---
    mean_b = jnp.dot(comb, avg_ref[...], preferred_element_type=f32)
    ex2_b = jnp.dot(comb * comb, avg_ref[...], preferred_element_type=f32)
    var_b = jnp.maximum(ex2_b - mean_b * mean_b, 0.0)
    out_ref[0] = ((comb - mean_b) * jax.lax.rsqrt(var_b + LN_EPS)
                  * gamma_ref[...] + beta_ref[...])


def _pick_batch_block(batch, num_vertices, target_rows=256):
    """Fold enough batches per grid step for >=128-row matmuls, keep >=2 grid steps (v7x)."""
    blk = min(batch, max(1, target_rows // max(1, num_vertices)))
    while blk > 1 and (batch % blk != 0 or batch // blk < 2):
        blk -= 1
    return max(1, blk)


def make_astgcn_block_forward(params, *, num_of_vertices, in_channels, num_of_timesteps,
                              batch_block=1, operand_dtype=jnp.float32):
    """One-time operator prep (hoisted out of the per-call path); returns a jitted forward."""
    (U1, U2, U3, W1, W2, W3, cheb, theta, time_w, time_b,
     res_w, res_b, gamma, beta) = params
    N, F_in, T = num_of_vertices, in_channels, num_of_timesteps
    K = cheb.shape[0]
    F_chev = theta.shape[2]
    F_time = time_w.shape[0]
    b_blk = batch_block
    f32 = jnp.float32
    # TODO(synk): time_strides > 1 not supported (stride-1 temporal convs only).

    eye_t = jnp.eye(T, dtype=f32)

    # attention projection operators -- every in-kernel contraction is a plain 2-D matmul
    u3e = jnp.kron(eye_t, U3.reshape(F_in, 1).astype(f32))               # (T*F_in, T)
    w3e = jnp.kron(eye_t, W3.reshape(F_in, 1).astype(f32))               # (T*F_in, T)
    repm = jnp.kron(eye_t, jnp.ones((F_in, 1), f32))                     # (T*F_in, T)
    repmt = jnp.transpose(repm)                                          # (T, T*F_in)
    selm = jnp.kron(jnp.ones((T, 1), f32), jnp.eye(F_in, dtype=f32))     # (T*F_in, F_in)
    w1c = W1.reshape(T, 1).astype(f32)
    u1blk = jnp.kron(jnp.eye(b_blk, dtype=f32), U1.reshape(1, N).astype(f32))  # (b_blk, b_blk*N)

    # Chebyshev / conv weights, block-expanded over time (built once, reused per call)
    chebt = jnp.transpose(cheb, (0, 2, 1)).astype(operand_dtype)         # (K, N, N)
    thetab = [jnp.kron(eye_t, theta[k].astype(f32)) for k in range(K)]   # K x (T*F_in, T*F_chev)
    rwb = jnp.kron(eye_t, jnp.transpose(res_w).astype(f32))              # (T*F_in, T*F_time)

    # banded 1x3 time-conv operator: [(t'*F_chev+c), (t*F_time+o)] = w[o, c, t'-t+1]
    w_jco = jnp.transpose(time_w, (2, 1, 0)).astype(f32)                 # (3, F_chev, F_time)
    tp = jnp.arange(T)[:, None]
    tt = jnp.arange(T)[None, :]
    shift = tp - tt + 1
    valid = ((shift >= 0) & (shift <= 2)).astype(f32)
    blocks = w_jco[jnp.clip(shift, 0, 2)] * valid[:, :, None, None]      # (T, T, F_chev, F_time)
    tconv = jnp.transpose(blocks, (0, 2, 1, 3)).reshape(T * F_chev, T * F_time)

    # fused xc-side operator: [ residual | theta_0 .. theta_{K-1} | U3 | W3 ]
    xc_ops = jnp.concatenate([rwb] + thetab + [u3e, w3e], axis=1)

    trb = jnp.tile((time_b + res_b).astype(f32), T).reshape(1, T * F_time)
    g_t = jnp.tile(gamma.astype(f32), T).reshape(1, T * F_time)
    b_t = jnp.tile(beta.astype(f32), T).reshape(1, T * F_time)
    avg = jnp.kron(eye_t, jnp.full((F_time, F_time), 1.0 / F_time, f32))  # (T*F_time, T*F_time)

    # bf16 is the native MXU input dtype on all generations; accumulation stays f32 in-kernel.
    # LayerNorm / small per-batch attention weights stay f32 (exact statistics, v5e-safe VPU).
    consts = (u1blk.astype(operand_dtype), U2.astype(f32), w1c, repmt, repm, selm,
              W2.astype(f32), chebt, xc_ops.astype(operand_dtype),
              tconv.astype(operand_dtype), trb, g_t, b_t, avg)

    kernel = functools.partial(
        _astgcn_block_kernel, b_blk=b_blk, n_nodes=N, n_t=T,
        f_chev=F_chev, f_time=F_time, k_cheb=K)

    def const_spec(a):
        nd = a.ndim
        return pl.BlockSpec(a.shape, lambda g, nd=nd: (0,) * nd)

    # explicit VMEM budget from the actual footprint (review: don't rely on the default
    # scoped limit); at production sizes also mark constant operands pl.Buffered(1).
    opsz = jnp.dtype(operand_dtype).itemsize
    const_bytes = sum(int(np.prod(c.shape)) * jnp.dtype(c.dtype).itemsize for c in consts)
    xc_bytes = b_blk * N * T * F_in * opsz
    out_bytes = b_blk * N * T * F_time * 4
    scr_bytes = b_blk * N * T * F_chev * 4
    vmem_limit = int(min(64 << 20,
                         max(16 << 20,
                             2 * (xc_bytes + out_bytes + const_bytes) + scr_bytes + (8 << 20))))

    @jax.jit
    def forward(x):
        B = x.shape[0]
        assert x.shape == (B, N, F_in, T), x.shape
        assert B % b_blk == 0, (B, b_blk)
        grid_len = B // b_blk
        # kernel-friendly layout: rows = (batch-in-block, node), cols = (t, f)
        xc = jnp.transpose(x, (0, 1, 3, 2)).reshape(grid_len, b_blk * N, T * F_in)
        xc = xc.astype(operand_dtype)

        out = pl.pallas_call(
            kernel,
            out_shape=jax.ShapeDtypeStruct((grid_len, b_blk * N, T * F_time), jnp.float32),
            grid=(grid_len,),
            in_specs=[pl.BlockSpec((1, b_blk * N, T * F_in), lambda g: (g, 0, 0))]
                     + [const_spec(c) for c in consts],
            out_specs=pl.BlockSpec((1, b_blk * N, T * F_time), lambda g: (g, 0, 0)),
            scratch_shapes=[pltpu.VMEM((b_blk * N, T * F_chev), jnp.float32)],
            compiler_params=pltpu.CompilerParams(
                dimension_semantics=("parallel",),
                vmem_limit_bytes=vmem_limit),
        )(xc, *consts)

        # (grid, b_blk*N, T*F_time) -> (B, N, F_time, T)   == PyTorch return layout
        return jnp.transpose(out.reshape(B, N, T, F_time), (0, 1, 3, 2))

    return forward


def ref_forward(x, U1, U2, U3, W1, W2, W3, cheb, theta, time_w, time_b,
                res_w, res_b, gamma, beta):
    """Pure-JAX mirror of the PyTorch ASTGCN_block.forward semantics."""
    B, N, F_in, T = x.shape
    K = cheb.shape[0]
    F_chev = theta.shape[2]
    F_time = time_w.shape[0]
    # Temporal attention
    lhs = jnp.einsum('bnft,n->btf', x, U1)
    lhs = jnp.einsum('btf,fn->btn', lhs, U2)
    rhs = jnp.einsum('f,bnft->bnt', U3, x)
    E = jax.nn.softmax(jnp.einsum('btn,bns->bts', lhs, rhs), axis=1)
    x_TAt = jnp.matmul(x.reshape(B, N * F_in, T), E).reshape(B, N, F_in, T)
    # Spatial attention
    lhs_s = jnp.einsum('bnft,t->bnf', x_TAt, W1)
    lhs_s = jnp.einsum('bnf,ft->bnt', lhs_s, W2)
    rhs_s = jnp.einsum('f,bnft->bnt', W3, x_TAt)
    S = jax.nn.softmax(jnp.einsum('bnt,bmt->bnm', lhs_s, rhs_s), axis=1)
    # Chebyshev conv with spatial attention
    gcn = jnp.zeros((B, N, F_chev, T), jnp.float32)
    for t in range(T):
        gs = x[:, :, :, t]
        acc = jnp.zeros((B, N, F_chev), jnp.float32)
        for k in range(K):
            TkS = cheb[k][None] * S
            rhs_c = jnp.einsum('bmn,bmf->bnf', TkS, gs)
            acc = acc + jnp.einsum('bnf,fo->bno', rhs_c, theta[k])
        gcn = gcn.at[:, :, :, t].set(acc)
    gcn = jax.nn.relu(gcn)
    # time conv (kernel (1,3), pad (0,1), stride 1) in (B, N, C, T) coordinates
    gcn_p = jnp.pad(gcn, ((0, 0), (0, 0), (0, 0), (1, 1)))
    tc = sum(jnp.einsum('bnct,oc->bnot', gcn_p[:, :, :, j:j + T], time_w[:, :, j])
             for j in range(3))
    tc = tc + time_b[None, None, :, None]
    # residual 1x1 conv
    res = jnp.einsum('bnct,oc->bnot', x, res_w) + res_b[None, None, :, None]
    comb = jax.nn.relu(res + tc)                       # (B, N, F_time, T)
    mean = comb.mean(axis=2, keepdims=True)
    var = ((comb - mean) ** 2).mean(axis=2, keepdims=True)
    out = (comb - mean) / jnp.sqrt(var + LN_EPS)
    out = out * gamma[None, None, :, None] + beta[None, None, :, None]
    return out


if __name__ == "__main__":
    # Small shapes consistent with ASTGCN_block: x is (B, N, F_in, T)
    B, N, F_in, T = 2, 16, 4, 8
    K, F_chev, F_time = 3, 16, 16          # time_strides = 1

    key = jax.random.PRNGKey(0)
    ks = jax.random.split(key, 12)
    s = 0.1
    x = jax.random.normal(ks[0], (B, N, F_in, T), jnp.float32)
    U1 = jax.random.normal(ks[1], (N,), jnp.float32) * s
    U2 = jax.random.normal(ks[2], (F_in, N), jnp.float32) * s
    U3 = jax.random.normal(ks[3], (F_in,), jnp.float32) * s
    W1 = jax.random.normal(ks[4], (T,), jnp.float32) * s
    W2 = jax.random.normal(ks[5], (F_in, T), jnp.float32) * s
    W3 = jax.random.normal(ks[6], (F_in,), jnp.float32) * s
    cheb = jax.random.normal(ks[7], (K, N, N), jnp.float32) * s          # cheb_polynomials
    theta = jax.random.normal(ks[8], (K, F_in, F_chev), jnp.float32) * s
    time_w = jax.random.normal(ks[9], (F_time, F_chev, 3), jnp.float32) * s   # (out,in,1,3) squeezed
    time_b = jax.random.uniform(ks[10], (F_time,), jnp.float32, 0.05, 0.15)
    res_w = jax.random.normal(ks[11], (F_time, F_in), jnp.float32) * s        # (out,in,1,1) squeezed
    res_b = jnp.linspace(0.05, 0.15, F_time, dtype=jnp.float32)
    gamma = 1.0 + 0.1 * jnp.sin(jnp.arange(F_time, dtype=jnp.float32))        # LayerNorm weight
    beta = 0.05 * jnp.cos(jnp.arange(F_time, dtype=jnp.float32))              # LayerNorm bias

    params = (U1, U2, U3, W1, W2, W3, cheb, theta, time_w, time_b,
              res_w, res_b, gamma, beta)

    def run_case(x_in, b_blk, op_dtype, tol, tag):
        fwd = make_astgcn_block_forward(
            params, num_of_vertices=N, in_channels=F_in, num_of_timesteps=T,
            batch_block=b_blk, operand_dtype=op_dtype)
        out = jax.block_until_ready(fwd(x_in))
        assert out.shape == (x_in.shape[0], N, F_time, T), out.shape
        ref = ref_forward(x_in, *params)
        err = float(jnp.max(jnp.abs(out - ref)))
        if not np.isfinite(err) or err > tol:
            raise AssertionError(f"{tag}: max abs err = {err} (tol {tol})")
        return err

    # 1) required small config, f32 operands, tight tolerance (was 5e-2 before)
    run_case(x, _pick_batch_block(B, N), jnp.float32, 2e-3, "f32 B=2")
    # 2) batch-folded path: 4 batches per grid step, grid of 2 (>= 2 steps for v7x)
    x8 = jax.random.normal(jax.random.PRNGKey(1), (8, N, F_in, T), jnp.float32)
    run_case(x8, _pick_batch_block(8, N), jnp.float32, 2e-3, "f32 B=8 folded")
    # 3) bf16 MXU-operand path (f32 accumulation / elementwise); bf16 rounding tolerance
    run_case(x, _pick_batch_block(B, N), jnp.bfloat16, 1e-1, "bf16 B=2")

    print("KERNEL_OK")
</pallas_src>

<mosaic_0001>
module attributes {stable_mosaic.version = 11 : i64} {
  func.func @_astgcn_block_kernel(%arg0: i32, %arg1: memref<1x16x32xf32, #tpu.memory_space<vmem>>, %arg2: memref<1x16xf32, #tpu.memory_space<vmem>>, %arg3: memref<4x16xf32, #tpu.memory_space<vmem>>, %arg4: memref<8x1xf32, #tpu.memory_space<vmem>>, %arg5: memref<8x32xf32, #tpu.memory_space<vmem>>, %arg6: memref<32x8xf32, #tpu.memory_space<vmem>>, %arg7: memref<32x4xf32, #tpu.memory_space<vmem>>, %arg8: memref<4x8xf32, #tpu.memory_space<vmem>>, %arg9: memref<3x16x16xf32, #tpu.memory_space<vmem>>, %arg10: memref<32x528xf32, #tpu.memory_space<vmem>>, %arg11: memref<128x128xf32, #tpu.memory_space<vmem>>, %arg12: memref<1x128xf32, #tpu.memory_space<vmem>>, %arg13: memref<1x128xf32, #tpu.memory_space<vmem>>, %arg14: memref<1x128xf32, #tpu.memory_space<vmem>>, %arg15: memref<128x128xf32, #tpu.memory_space<vmem>>, %arg16: memref<1x16x128xf32, #tpu.memory_space<vmem>>, %arg17: memref<16x128xf32, #tpu.memory_space<vmem>>) attributes {dimension_semantics = [#tpu.dimension_semantics<parallel>], iteration_bounds = array<i64: 2>, scalar_prefetch = 0 : i64, scratch_operands = 1 : i64, tpu.core_type = #tpu.core_type<tc>, window_params = [{transform_indices = @transform_0, window_bounds = array<i64: 1, 16, 32>}, {pipeline_mode = #tpu.pipeline_mode<synchronous>, transform_indices = @transform_1, window_bounds = array<i64: 1, 16>}, {pipeline_mode = #tpu.pipeline_mode<synchronous>, transform_indices = @transform_2, window_bounds = array<i64: 4, 16>}, {pipeline_mode = #tpu.pipeline_mode<synchronous>, transform_indices = @transform_3, window_bounds = array<i64: 8, 1>}, {pipeline_mode = #tpu.pipeline_mode<synchronous>, transform_indices = @transform_4, window_bounds = array<i64: 8, 32>}, {pipeline_mode = #tpu.pipeline_mode<synchronous>, transform_indices = @transform_5, window_bounds = array<i64: 32, 8>}, {pipeline_mode = #tpu.pipeline_mode<synchronous>, transform_indices = @transform_6, window_bounds = array<i64: 32, 4>}, {pipeline_mode = #tpu.pipeline_mode<synchronous>, transform_indices = @transform_7, window_bounds = array<i64: 4, 8>}, {pipeline_mode = #tpu.pipeline_mode<synchronous>, transform_indices = @transform_8, window_bounds = array<i64: 3, 16, 16>}, {pipeline_mode = #tpu.pipeline_mode<synchronous>, transform_indices = @transform_9, window_bounds = array<i64: 32, 528>}, {pipeline_mode = #tpu.pipeline_mode<synchronous>, transform_indices = @transform_10, window_bounds = array<i64: 128, 128>}, {pipeline_mode = #tpu.pipeline_mode<synchronous>, transform_indices = @transform_11, window_bounds = array<i64: 1, 128>}, {pipeline_mode = #tpu.pipeline_mode<synchronous>, transform_indices = @transform_12, window_bounds = array<i64: 1, 128>}, {pipeline_mode = #tpu.pipeline_mode<synchronous>, transform_indices = @transform_13, window_bounds = array<i64: 1, 128>}, {pipeline_mode = #tpu.pipeline_mode<synchronous>, transform_indices = @transform_14, window_bounds = array<i64: 128, 128>}, {transform_indices = @transform_15, window_bounds = array<i64: 1, 16, 128>}]} {
    %c0 = arith.constant 0 : index
    %c0_0 = arith.constant 0 : index
    %c0_1 = arith.constant 0 : index
    %0 = vector.load %arg1[%c0, %c0_0, %c0_1] : memref<1x16x32xf32, #tpu.memory_space<vmem>>, vector<1x16x32xf32>
    %1 = vector.shape_cast %0 : vector<1x16x32xf32> to vector<16x32xf32>
    %c0_2 = arith.constant 0 : index
    %c0_3 = arith.constant 0 : index
    %2 = vector.load %arg10[%c0_2, %c0_3] : memref<32x528xf32, #tpu.memory_space<vmem>>, vector<32x528xf32>
    %cst = arith.constant dense<0.000000e+00> : vector<16x528xf32>
    %3 = tpu.matmul %1, %2, %cst {dimension_numbers = #tpu.dot_dimension_numbers<[1], [0], [0], [1], [0, 0, 1, 1], [], []>} : vector<16x32xf32>, vector<32x528xf32>, vector<16x528xf32> -> vector<16x528xf32>
    %4 = vector.extract_strided_slice %3 {offsets = [0, 0], sizes = [16, 128], strides = [1, 1]} : vector<16x528xf32> to vector<16x128xf32>
    %5 = vector.extract_strided_slice %3 {offsets = [0, 512], sizes = [16, 8], strides = [1, 1]} : vector<16x528xf32> to vector<16x8xf32>
    %6 = vector.extract_strided_slice %3 {offsets = [0, 520], sizes = [16, 8], strides = [1, 1]} : vector<16x528xf32> to vector<16x8xf32>
    %c0_4 = arith.constant 0 : index
    %c0_5 = arith.constant 0 : index
    %7 = vector.load %arg2[%c0_4, %c0_5] : memref<1x16xf32, #tpu.memory_space<vmem>>, vector<1x16xf32>
    %cst_6 = arith.constant dense<0.000000e+00> : vector<1x32xf32>
    %8 = tpu.matmul %7, %1, %cst_6 {dimension_numbers = #tpu.dot_dimension_numbers<[1], [0], [0], [1], [0, 0, 1, 1], [], []>} : vector<1x16xf32>, vector<16x32xf32>, vector<1x32xf32> -> vector<1x32xf32>
    %c0_7 = arith.constant 0 : index
    %c0_8 = arith.constant 0 : index
    %9 = vector.load %arg5[%c0_7, %c0_8] : memref<8x32xf32, #tpu.memory_space<vmem>>, vector<8x32xf32>
    %10 = vector.broadcast %8 : vector<1x32xf32> to vector<8x32xf32>
    %11 = arith.mulf %9, %10 : vector<8x32xf32>
    %c0_9 = arith.constant 0 : index
    %c0_10 = arith.constant 0 : index
    %12 = vector.load %arg7[%c0_9, %c0_10] : memref<32x4xf32, #tpu.memory_space<vmem>>, vector<32x4xf32>
    %cst_11 = arith.constant dense<0.000000e+00> : vector<8x4xf32>
    %13 = tpu.matmul %11, %12, %cst_11 {dimension_numbers = #tpu.dot_dimension_numbers<[1], [0], [0], [1], [0, 0, 1, 1], [], []>} : vector<8x32xf32>, vector<32x4xf32>, vector<8x4xf32> -> vector<8x4xf32>
    %c0_12 = arith.constant 0 : index
    %c0_13 = arith.constant 0 : index
    %14 = vector.load %arg3[%c0_12, %c0_13] : memref<4x16xf32, #tpu.memory_space<vmem>>, vector<4x16xf32>
    %cst_14 = arith.constant dense<0.000000e+00> : vector<4x8xf32>
    %15 = tpu.matmul %14, %5, %cst_14 {dimension_numbers = #tpu.dot_dimension_numbers<[1], [0], [0], [1], [0, 0, 1, 1], [], []>} : vector<4x16xf32>, vector<16x8xf32>, vector<4x8xf32> -> vector<4x8xf32>
    %cst_15 = arith.constant dense<0.000000e+00> : vector<8x8xf32>
    %16 = tpu.matmul %13, %15, %cst_15 {dimension_numbers = #tpu.dot_dimension_numbers<[1], [0], [0], [1], [0, 0, 1, 1], [], []>} : vector<8x4xf32>, vector<4x8xf32>, vector<8x8xf32> -> vector<8x8xf32>
    %cst_16 = arith.constant dense<0xFF800000> : vector<8xf32>
    %17 = vector.multi_reduction <maximumf>, %16, %cst_16 [0] : vector<8x8xf32> to vector<8xf32>
    %18 = vector.shape_cast %17 : vector<8xf32> to vector<1x8xf32>
    %19 = vector.broadcast %18 : vector<1x8xf32> to vector<8x8xf32>
    %20 = arith.subf %16, %19 : vector<8x8xf32>
    %21 = math.exp %20 : vector<8x8xf32>
    %cst_17 = arith.constant dense<0.000000e+00> : vector<8xf32>
    %22 = vector.multi_reduction <add>, %21, %cst_17 [0] : vector<8x8xf32> to vector<8xf32>
    %23 = vector.shape_cast %22 : vector<8xf32> to vector<1x8xf32>
    %24 = tpu.reciprocal %23 {approx = true} : vector<1x8xf32> -> vector<1x8xf32>
    %25 = vector.broadcast %24 : vector<1x8xf32> to vector<8x8xf32>
    %26 = arith.mulf %21, %25 : vector<8x8xf32>
    %c0_18 = arith.constant 0 : index
    %c0_19 = arith.constant 0 : index
    %27 = vector.load %arg4[%c0_18, %c0_19] : memref<8x1xf32, #tpu.memory_space<vmem>>, vector<8x1xf32>
    %cst_20 = arith.constant dense<0.000000e+00> : vector<8x1xf32>
    %28 = tpu.matmul %26, %27, %cst_20 {dimension_numbers = #tpu.dot_dimension_numbers<[1], [0], [0], [1], [0, 0, 1, 1], [], []>} : vector<8x8xf32>, vector<8x1xf32>, vector<8x1xf32> -> vector<8x1xf32>
    %c0_21 = arith.constant 0 : index
    %c0_22 = arith.constant 0 : index
    %29 = vector.load %arg6[%c0_21, %c0_22] : memref<32x8xf32, #tpu.memory_space<vmem>>, vector<32x8xf32>
    %cst_23 = arith.constant dense<0.000000e+00> : vector<32x1xf32>
    %30 = tpu.matmul %29, %28, %cst_23 {dimension_numbers = #tpu.dot_dimension_numbers<[1], [0], [0], [1], [0, 0, 1, 1], [], []>} : vector<32x8xf32>, vector<8x1xf32>, vector<32x1xf32> -> vector<32x1xf32>
    %c0_24 = arith.constant 0 : index
    %c0_25 = arith.constant 0 : index
    %31 = vector.load %arg7[%c0_24, %c0_25] : memref<32x4xf32, #tpu.memory_space<vmem>>, vector<32x4xf32>
    %32 = vector.broadcast %30 : vector<32x1xf32> to vector<32x4xf32>
    %33 = arith.mulf %31, %32 : vector<32x4xf32>
    %cst_26 = arith.constant dense<0.000000e+00> : vector<16x4xf32>
    %34 = tpu.matmul %1, %33, %cst_26 {dimension_numbers = #tpu.dot_dimension_numbers<[1], [0], [0], [1], [0, 0, 1, 1], [], []>} : vector<16x32xf32>, vector<32x4xf32>, vector<16x4xf32> -> vector<16x4xf32>
    %c0_27 = arith.constant 0 : index
    %c0_28 = arith.constant 0 : index
    %35 = vector.load %arg8[%c0_27, %c0_28] : memref<4x8xf32, #tpu.memory_space<vmem>>, vector<4x8xf32>
    %cst_29 = arith.constant dense<0.000000e+00> : vector<16x8xf32>
    %36 = tpu.matmul %34, %35, %cst_29 {dimension_numbers = #tpu.dot_dimension_numbers<[1], [0], [0], [1], [0, 0, 1, 1], [], []>} : vector<16x4xf32>, vector<4x8xf32>, vector<16x8xf32> -> vector<16x8xf32>
    %cst_30 = arith.constant dense<0.000000e+00> : vector<16x8xf32>
    %37 = tpu.matmul %6, %26, %cst_30 {dimension_numbers = #tpu.dot_dimension_numbers<[1], [0], [0], [1], [0, 0, 1, 1], [], []>} : vector<16x8xf32>, vector<8x8xf32>, vector<16x8xf32> -> vector<16x8xf32>
    %cst_31 = arith.constant dense<0.000000e+00> : vector<16x16xf32>
    %38 = tpu.matmul %37, %36, %cst_31 {dimension_numbers = #tpu.dot_dimension_numbers<[1], [1], [0], [0], [0, 0, 1, 0], [], []>} : vector<16x8xf32>, vector<16x8xf32>, vector<16x16xf32> -> vector<16x16xf32>
    %cst_32 = arith.constant dense<0xFF800000> : vector<16xf32>
    %39 = vector.multi_reduction <maximumf>, %38, %cst_32 [1] : vector<16x16xf32> to vector<16xf32>
    %40 = vector.shape_cast %39 : vector<16xf32> to vector<16x1xf32>
    %41 = vector.broadcast %40 : vector<16x1xf32> to vector<16x16xf32>
    %42 = arith.subf %38, %41 : vector<16x16xf32>
    %43 = math.exp %42 : vector<16x16xf32>
    %cst_33 = arith.constant dense<0.000000e+00> : vector<16xf32>
    %44 = vector.multi_reduction <add>, %43, %cst_33 [1] : vector<16x16xf32> to vector<16xf32>
    %45 = vector.shape_cast %44 : vector<16xf32> to vector<16x1xf32>
    %46 = tpu.reciprocal %45 {approx = true} : vector<16x1xf32> -> vector<16x1xf32>
    %47 = vector.broadcast %46 : vector<16x1xf32> to vector<16x16xf32>
    %48 = arith.mulf %43, %47 : vector<16x16xf32>
    %c0_34 = arith.constant 0 : index
    %c0_35 = arith.constant 0 : index
    %c0_36 = arith.constant 0 : index
    %49 = vector.load %arg9[%c0_34, %c0_35, %c0_36] : memref<3x16x16xf32, #tpu.memory_space<vmem>>, vector<1x16x16xf32>
    %50 = vector.shape_cast %49 : vector<1x16x16xf32> to vector<16x16xf32>
    %51 = arith.mulf %50, %48 : vector<16x16xf32>
    %52 = vector.extract_strided_slice %3 {offsets = [0, 128], sizes = [16, 128], strides = [1, 1]} : vector<16x528xf32> to vector<16x128xf32>
    %cst_37 = arith.constant dense<0.000000e+00> : vector<16x128xf32>
    %53 = tpu.matmul %51, %52, %cst_37 {dimension_numbers = #tpu.dot_dimension_numbers<[1], [0], [0], [1], [0, 0, 1, 1], [], []>} : vector<16x16xf32>, vector<16x128xf32>, vector<16x128xf32> -> vector<16x128xf32>
    %54 = vector.extract_strided_slice %3 {offsets = [0, 256], sizes = [16, 128], strides = [1, 1]} : vector<16x528xf32> to vector<16x128xf32>
    %c1 = arith.constant 1 : index
    %c0_38 = arith.constant 0 : index
    %c0_39 = arith.constant 0 : index
    %55 = vector.load %arg9[%c1, %c0_38, %c0_39] : memref<3x16x16xf32, #tpu.memory_space<vmem>>, vector<1x16x16xf32>
    %56 = vector.shape_cast %55 : vector<1x16x16xf32> to vector<16x16xf32>
    %57 = arith.mulf %56, %48 : vector<16x16xf32>
    %cst_40 = arith.constant dense<0.000000e+00> : vector<16x128xf32>
    %58 = tpu.matmul %57, %54, %cst_40 {dimension_numbers = #tpu.dot_dimension_numbers<[1], [0], [0], [1], [0, 0, 1, 1], [], []>} : vector<16x16xf32>, vector<16x128xf32>, vector<16x128xf32> -> vector<16x128xf32>
    %59 = arith.addf %53, %58 : vector<16x128xf32>
    %60 = vector.extract_strided_slice %3 {offsets = [0, 384], sizes = [16, 128], strides = [1, 1]} : vector<16x528xf32> to vector<16x128xf32>
    %c2 = arith.constant 2 : index
    %c0_41 = arith.constant 0 : index
    %c0_42 = arith.constant 0 : index
    %61 = vector.load %arg9[%c2, %c0_41, %c0_42] : memref<3x16x16xf32, #tpu.memory_space<vmem>>, vector<1x16x16xf32>
    %62 = vector.shape_cast %61 : vector<1x16x16xf32> to vector<16x16xf32>
    %63 = arith.mulf %62, %48 : vector<16x16xf32>
    %cst_43 = arith.constant dense<0.000000e+00> : vector<16x128xf32>
    %64 = tpu.matmul %63, %60, %cst_43 {dimension_numbers = #tpu.dot_dimension_numbers<[1], [0], [0], [1], [0, 0, 1, 1], [], []>} : vector<16x16xf32>, vector<16x128xf32>, vector<16x128xf32> -> vector<16x128xf32>
    %65 = arith.addf %59, %64 : vector<16x128xf32>
    %cst_44 = arith.constant 0.000000e+00 : f32
    %66 = vector.broadcast %cst_44 : f32 to vector<16x128xf32>
    %67 = arith.maximumf %65, %66 : vector<16x128xf32>
    %c0_45 = arith.constant 0 : index
    %c0_46 = arith.constant 0 : index
    %68 = vector.load %arg17[%c0_45, %c0_46] : memref<16x128xf32, #tpu.memory_space<vmem>>, vector<16x128xf32>
    tpu.vector_store %arg17[%c0_45, %c0_46], %67 {strides = array<i32>} : memref<16x128xf32, #tpu.memory_space<vmem>>, vector<16x128xf32>,
    %c0_47 = arith.constant 0 : index
    %c0_48 = arith.constant 0 : index
    %69 = vector.load %arg17[%c0_47, %c0_48] : memref<16x128xf32, #tpu.memory_space<vmem>>, vector<16x128xf32>
    %c0_49 = arith.constant 0 : index
    %c0_50 = arith.constant 0 : index
    %70 = vector.load %arg11[%c0_49, %c0_50] : memref<128x128xf32, #tpu.memory_space<vmem>>, vector<128x128xf32>
    %cst_51 = arith.constant dense<0.000000e+00> : vector<16x128xf32>
    %71 = tpu.matmul %69, %70, %cst_51 {dimension_numbers = #tpu.dot_dimension_numbers<[1], [0], [0], [1], [0, 0, 1, 1], [], []>} : vector<16x128xf32>, vector<128x128xf32>, vector<16x128xf32> -> vector<16x128xf32>
    %72 = arith.addf %71, %4 : vector<16x128xf32>
    %c0_52 = arith.constant 0 : index
    %c0_53 = arith.constant 0 : index
    %73 = vector.load %arg12[%c0_52, %c0_53] : memref<1x128xf32, #tpu.memory_space<vmem>>, vector<1x128xf32>
    %74 = vector.broadcast %73 : vector<1x128xf32> to vector<16x128xf32>
    %75 = arith.addf %72, %74 : vector<16x128xf32>
    %cst_54 = arith.constant 0.000000e+00 : f32
    %76 = vector.broadcast %cst_54 : f32 to vector<16x128xf32>
    %77 = arith.maximumf %75, %76 : vector<16x128xf32>
    %c0_55 = arith.constant 0 : index
    %c0_56 = arith.constant 0 : index
    %78 = vector.load %arg15[%c0_55, %c0_56] : memref<128x128xf32, #tpu.memory_space<vmem>>, vector<128x128xf32>
    %cst_57 = arith.constant dense<0.000000e+00> : vector<16x128xf32>
    %79 = tpu.matmul %77, %78, %cst_57 {dimension_numbers = #tpu.dot_dimension_numbers<[1], [0], [0], [1], [0, 0, 1, 1], [], []>} : vector<16x128xf32>, vector<128x128xf32>, vector<16x128xf32> -> vector<16x128xf32>
    %80 = arith.mulf %77, %77 : vector<16x128xf32>
    %c0_58 = arith.constant 0 : index
    %c0_59 = arith.constant 0 : index
    %81 = vector.load %arg15[%c0_58, %c0_59] : memref<128x128xf32, #tpu.memory_space<vmem>>, vector<128x128xf32>
    %cst_60 = arith.constant dense<0.000000e+00> : vector<16x128xf32>
    %82 = tpu.matmul %80, %81, %cst_60 {dimension_numbers = #tpu.dot_dimension_numbers<[1], [0], [0], [1], [0, 0, 1, 1], [], []>} : vector<16x128xf32>, vector<128x128xf32>, vector<16x128xf32> -> vector<16x128xf32>
    %83 = arith.mulf %79, %79 : vector<16x128xf32>
    %84 = arith.subf %82, %83 : vector<16x128xf32>
    %cst_61 = arith.constant 0.000000e+00 : f32
    %85 = vector.broadcast %cst_61 : f32 to vector<16x128xf32>
    %86 = arith.maximumf %84, %85 : vector<16x128xf32>
    %87 = arith.subf %77, %79 : vector<16x128xf32>
    %cst_62 = arith.constant 9.99999974E-6 : f32
    %88 = vector.broadcast %cst_62 : f32 to vector<16x128xf32>
    %89 = arith.addf %86, %88 : vector<16x128xf32>
    %90 = math.rsqrt %89 : vector<16x128xf32>
    %91 = arith.mulf %87, %90 : vector<16x128xf32>
    %c0_63 = arith.constant 0 : index
    %c0_64 = arith.constant 0 : index
    %92 = vector.load %arg13[%c0_63, %c0_64] : memref<1x128xf32, #tpu.memory_space<vmem>>, vector<1x128xf32>
    %93 = vector.broadcast %92 : vector<1x128xf32> to vector<16x128xf32>
    %94 = arith.mulf %91, %93 : vector<16x128xf32>
    %c0_65 = arith.constant 0 : index
    %c0_66 = arith.constant 0 : index
    %95 = vector.load %arg14[%c0_65, %c0_66] : memref<1x128xf32, #tpu.memory_space<vmem>>, vector<1x128xf32>
    %96 = vector.broadcast %95 : vector<1x128xf32> to vector<16x128xf32>
    %97 = arith.addf %94, %96 : vector<16x128xf32>
    %c0_67 = arith.constant 0 : index
    %c0_68 = arith.constant 0 : index
    %c0_69 = arith.constant 0 : index
    %98 = vector.load %arg16[%c0_67, %c0_68, %c0_69] : memref<1x16x128xf32, #tpu.memory_space<vmem>>, vector<1x16x128xf32>
    %99 = vector.shape_cast %98 : vector<1x16x128xf32> to vector<16x128xf32>
    %100 = vector.shape_cast %97 : vector<16x128xf32> to vector<1x16x128xf32>
    tpu.vector_store %arg16[%c0_67, %c0_68, %c0_69], %100 {strides = array<i32>} : memref<1x16x128xf32, #tpu.memory_space<vmem>>, vector<1x16x128xf32>,
    return
  }
  func.func @transform_0(%arg0: i32) -> (i32, i32, i32) {
    %c0_i32 = arith.constant 0 : i32
    %c0_i32_0 = arith.constant 0 : i32
    %c0_i32_1 = arith.constant 0 : i32
    return %arg0, %c0_i32, %c0_i32_0 : i32, i32, i32
  }
  func.func @transform_1(%arg0: i32) -> (i32, i32) {
    %c0_i32 = arith.constant 0 : i32
    %c0_i32_0 = arith.constant 0 : i32
    %c0_i32_1 = arith.constant 0 : i32
    return %c0_i32, %c0_i32_0 : i32, i32
  }
  func.func @transform_2(%arg0: i32) -> (i32, i32) {
    %c0_i32 = arith.constant 0 : i32
    %c0_i32_0 = arith.constant 0 : i32
    %c0_i32_1 = arith.constant 0 : i32
    return %c0_i32, %c0_i32_0 : i32, i32
  }
  func.func @transform_3(%arg0: i32) -> (i32, i32) {
    %c0_i32 = arith.constant 0 : i32
    %c0_i32_0 = arith.constant 0 : i32
    %c0_i32_1 = arith.constant 0 : i32
    return %c0_i32, %c0_i32_0 : i32, i32
  }
  func.func @transform_4(%arg0: i32) -> (i32, i32) {
    %c0_i32 = arith.constant 0 : i32
    %c0_i32_0 = arith.constant 0 : i32
    %c0_i32_1 = arith.constant 0 : i32
    return %c0_i32, %c0_i32_0 : i32, i32
  }
  func.func @transform_5(%arg0: i32) -> (i32, i32) {
    %c0_i32 = arith.constant 0 : i32
    %c0_i32_0 = arith.constant 0 : i32
    %c0_i32_1 = arith.constant 0 : i32
    return %c0_i32, %c0_i32_0 : i32, i32
  }
  func.func @transform_6(%arg0: i32) -> (i32, i32) {
    %c0_i32 = arith.constant 0 : i32
    %c0_i32_0 = arith.constant 0 : i32
    %c0_i32_1 = arith.constant 0 : i32
    return %c0_i32, %c0_i32_0 : i32, i32
  }
  func.func @transform_7(%arg0: i32) -> (i32, i32) {
    %c0_i32 = arith.constant 0 : i32
    %c0_i32_0 = arith.constant 0 : i32
    %c0_i32_1 = arith.constant 0 : i32
    return %c0_i32, %c0_i32_0 : i32, i32
  }
  func.func @transform_8(%arg0: i32) -> (i32, i32, i32) {
    %c0_i32 = arith.constant 0 : i32
    %c0_i32_0 = arith.constant 0 : i32
    %c0_i32_1 = arith.constant 0 : i32
    %c0_i32_2 = arith.constant 0 : i32
    return %c0_i32, %c0_i32_0, %c0_i32_1 : i32, i32, i32
  }
  func.func @transform_9(%arg0: i32) -> (i32, i32) {
    %c0_i32 = arith.constant 0 : i32
    %c0_i32_0 = arith.constant 0 : i32
    %c0_i32_1 = arith.constant 0 : i32
    return %c0_i32, %c0_i32_0 : i32, i32
  }
  func.func @transform_10(%arg0: i32) -> (i32, i32) {
    %c0_i32 = arith.constant 0 : i32
    %c0_i32_0 = arith.constant 0 : i32
    %c0_i32_1 = arith.constant 0 : i32
    return %c0_i32, %c0_i32_0 : i32, i32
  }
  func.func @transform_11(%arg0: i32) -> (i32, i32) {
    %c0_i32 = arith.constant 0 : i32
    %c0_i32_0 = arith.constant 0 : i32
    %c0_i32_1 = arith.constant 0 : i32
    return %c0_i32, %c0_i32_0 : i32, i32
  }
  func.func @transform_12(%arg0: i32) -> (i32, i32) {
    %c0_i32 = arith.constant 0 : i32
    %c0_i32_0 = arith.constant 0 : i32
    %c0_i32_1 = arith.constant 0 : i32
    return %c0_i32, %c0_i32_0 : i32, i32
  }
  func.func @transform_13(%arg0: i32) -> (i32, i32) {
    %c0_i32 = arith.constant 0 : i32
    %c0_i32_0 = arith.constant 0 : i32
    %c0_i32_1 = arith.constant 0 : i32
    return %c0_i32, %c0_i32_0 : i32, i32
  }
  func.func @transform_14(%arg0: i32) -> (i32, i32) {
    %c0_i32 = arith.constant 0 : i32
    %c0_i32_0 = arith.constant 0 : i32
    %c0_i32_1 = arith.constant 0 : i32
    return %c0_i32, %c0_i32_0 : i32, i32
  }
  func.func @transform_15(%arg0: i32) -> (i32, i32, i32) {
    %c0_i32 = arith.constant 0 : i32
    %c0_i32_0 = arith.constant 0 : i32
    %c0_i32_1 = arith.constant 0 : i32
    return %arg0, %c0_i32, %c0_i32_0 : i32, i32, i32
  }
}

</mosaic_0001>

<llo_original>
// kernel: forward.1
$region0: #{forward.1}
  #allocation0 [shape = 'u32[]', space=smem, size = 0x4, offset = 0x4, fixed_abs, tag = 'smem constant byte address 0x4 - core index']
  #allocation1 [shape = 'u32[144,128]{1,0:T(1,128)}', space=vmem, size = 0x12000, scoped, tag = 'internal scratch']
  #allocation2 [shape = 'f32[16,128]{1,0:T(8,128)}', space=vmem, size = 0x2000, scoped, tag = 'scratch operand']
  %s0 = inlined_call_operand.vmem [shape: f32[2,16,32], index: 0, kind: input, shape index: {}]
  %s1 = inlined_call_operand.hbm [shape: f32[1,16], index: 1, kind: input, shape index: {}]
  %s2 = inlined_call_operand.vmem [shape: f32[4,16], index: 2, kind: input, shape index: {}]
  %s3 = inlined_call_operand.vmem [shape: f32[8,1], index: 3, kind: input, shape index: {}]
  %s4 = inlined_call_operand.vmem [shape: f32[8,32], index: 4, kind: input, shape index: {}]
  %s5 = inlined_call_operand.hbm [shape: f32[32,8], index: 5, kind: input, shape index: {}]
  %s6 = inlined_call_operand.vmem [shape: f32[32,4], index: 6, kind: input, shape index: {}]
  %s7 = inlined_call_operand.vmem [shape: f32[4,8], index: 7, kind: input, shape index: {}]
  %s8 = inlined_call_operand.vmem [shape: f32[3,16,16], index: 8, kind: input, shape index: {}]
  %s9 = inlined_call_operand.vmem [shape: f32[32,528], index: 9, kind: input, shape index: {}]
  %s10 = inlined_call_operand.hbm [shape: f32[128,128], index: 10, kind: input, shape index: {}]
  %s11 = inlined_call_operand.vmem [shape: f32[1,128], index: 11, kind: input, shape index: {}]
  %s12 = inlined_call_operand.vmem [shape: f32[1,128], index: 12, kind: input, shape index: {}]
  %s13 = inlined_call_operand.vmem [shape: f32[1,128], index: 13, kind: input, shape index: {}]
  %s14 = inlined_call_operand.hbm [shape: f32[128,128], index: 14, kind: input, shape index: {}]
  %s15 = inlined_call_operand.vmem [shape: f32[2,16,128], index: 15, kind: output, shape index: {}]
  %s16 = sld [smem:[#allocation0]]
  $region109: #{forward.1} parent=0
    _
  %s18 = ssub.s32 1, %s16
  %s19 = scalar_select 0, %s18, %s16
  $region1: #{forward.1} parent=0
    #allocation3 [shape = 'u8[512]{0}', space=vmem, size = 0x400, scoped, tag = 'input window, operand 1, single buffered']
    #allocation4 [shape = 's32[2]{0}', space=sflag, size = 0x8, scoped, tag = 'scoped memory for forward.1']
    #allocation5 [shape = 'u8[16384]{0}', space=vmem, size = 0x4000, scoped, tag = 'input window, operand 5, single buffered']
    #allocation6 [shape = 's32[1]{0}', space=sflag, size = 0x4, scoped, tag = 'scoped memory for forward.1']
    #allocation7 [shape = 'u8[65536]{0}', space=vmem, size = 0x10000, scoped, tag = 'input window, operand 10, single buffered']
    #allocation8 [shape = 'u8[65536]{0}', space=vmem, size = 0x10000, scoped, tag = 'input window, operand 14, single buffered']
    #allocation9 [shape = 's32[1]{0}', space=sflag, size = 0x4, scoped, tag = 'scoped memory for forward.1']
    %20 = vsyncpa [#allocation4], 0
    %21 = vsyncpa [#allocation6], 0
    %22 = vsyncpa [#allocation9], 0
    loop: start=0, step=1, limit=4
    $region2: #{forward.1} parent=1 // loop_pre_header
      _
    $region3: #{forward.1} parent=1 // loop_header
      %s24 = sphi 0, %s28
      %p25 = scmp.ge.s32.totalorder %s24, 4
      %s34 = sphi 0, %s36
      %s37 = sphi 0, %s34
      %s38 = sphi 0, %s37
      %s54 = sphi 0, %s38
      %s58 = sphi 0, %s58
      %s60 = sphi 0, %s58
      %s61 = sphi 0, %s60
      %s75 = sphi 0, %s61
      %s79 = sphi 0, %s79
      %s81 = sphi 0, %s79
      %s82 = sphi 0, %s81
      %s96 = sphi 0, %s82
      %s100 = sphi 0, %s100
      %s102 = sphi 0, %s100
      %s103 = sphi 0, %s102
      %s117 = sphi 0, %s103
      %s121 = sphi 0, %s121
      %s123 = sphi 0, %s121
      %s124 = sphi 0, %s123
      %s138 = sphi 0, %s124
      %s142 = sphi 0, %s142
      %s144 = sphi 0, %s142
      %s145 = sphi 0, %s144
      %s159 = sphi 0, %s145
      %s163 = sphi 0, %s163
      %s165 = sphi 0, %s163
      %s166 = sphi 0, %s165
      %s180 = sphi 0, %s166
      %s184 = sphi 0, %s184
      %s186 = sphi 0, %s184
      %s187 = sphi 0, %s186
      %s201 = sphi 0, %s187
      %s205 = sphi 0, %s205
      %s207 = sphi 0, %s205
      %s208 = sphi 0, %s207
      %s222 = sphi 0, %s208
      %s226 = sphi 0, %s226
      %s228 = sphi 0, %s226
      %s229 = sphi 0, %s228
      %s243 = sphi 0, %s229
      %s247 = sphi 0, %s247
      %s249 = sphi 0, %s247
      %s250 = sphi 0, %s249
      %s264 = sphi 0, %s250
      %s268 = sphi 0, %s268
      %s270 = sphi 0, %s268
      %s271 = sphi 0, %s270
      %s285 = sphi 0, %s271
      %s289 = sphi 0, %s289
      %s291 = sphi 0, %s289
      %s292 = sphi 0, %s291
      %s306 = sphi 0, %s292
      %s310 = sphi 0, %s310
      %s312 = sphi 0, %s310
      %s313 = sphi 0, %s312
      %s327 = sphi 0, %s313
      %s331 = sphi 0, %s331
      %s333 = sphi 0, %s331
      %s334 = sphi 0, %s333
      %s348 = sphi 0, %s334
      %s354 = sphi 0, %s356
      %s357 = sphi 0, %s354
      %s358 = sphi 0, %s357
      %s374 = sphi 0, %s358
    $region4: #{forward.1} parent=1 // loop_header_branch
      %27 = sbr.rel (%p25) target = $region8
    $region5: #{forward.1} parent=1 // loop_body
      %s29 = ssub.s32 %s24, 1
      %s30 = ssub.s32 %s24, 2
      %s31 = sadd.s32 %s24, 1
      %s32 = ssub.s32 %s24, %s31
      %p33 = scmp.eq.s32.totalorder %s32, 0
      %s35 = sadd.s32 %s34, 1
      %s36 = scalar_select %p33, %s34, %s35
      %p39 = pneg %p33
      %p40 = scmp.eq.s32.totalorder %s24, 1
      %p41 = por %p39, %p40
      %p42 = scmp.ne.s32.totalorder %s34, %s37
      %p43 = scmp.eq.s32.totalorder %s24, 0
      %p44 = por %p42, %p43
      %p45 = scmp.ne.s32.totalorder %s34, %s37
      %p46 = scmp.eq.s32.totalorder %s29, 1
      %p47 = por %p45, %p46
      %p48 = scmp.ne.s32.totalorder %s37, %s38
      %p49 = scmp.eq.s32.totalorder %s29, 0
      %p50 = por %p48, %p49
      %p51 = scmp.ne.s32.totalorder %s37, %s38
      %p52 = scmp.eq.s32.totalorder %s30, 1
      %p53 = por %p51, %p52
      %p55 = scmp.ne.s32.totalorder %s38, %s54
      %p56 = scmp.eq.s32.totalorder %s30, 0
      %p57 = por %p55, %p56
      %s59 = sadd.s32 %s58, 1
      %p62 = scmp.eq.s32.totalorder %s24, 1
      %p63 = scmp.ne.s32.totalorder %s58, %s60
      %p64 = scmp.eq.s32.totalorder %s24, 0
      %p65 = por %p63, %p64
      %p66 = scmp.ne.s32.totalorder %s58, %s60
      %p67 = scmp.eq.s32.totalorder %s29, 1
      %p68 = por %p66, %p67
      %p69 = scmp.ne.s32.totalorder %s60, %s61
      %p70 = scmp.eq.s32.totalorder %s29, 0
      %p71 = por %p69, %p70
      %p72 = scmp.ne.s32.totalorder %s60, %s61
      %p73 = scmp.eq.s32.totalorder %s30, 1
      %p74 = por %p72, %p73
      %p76 = scmp.ne.s32.totalorder %s61, %s75
      %p77 = scmp.eq.s32.totalorder %s30, 0
      %p78 = por %p76, %p77
      %s80 = sadd.s32 %s79, 1
      %p83 = scmp.eq.s32.totalorder %s24, 1
      %p84 = scmp.ne.s32.totalorder %s79, %s81
      %p85 = scmp.eq.s32.totalorder %s24, 0
      %p86 = por %p84, %p85
      %p87 = scmp.ne.s32.totalorder %s79, %s81
      %p88 = scmp.eq.s32.totalorder %s29, 1
      %p89 = por %p87, %p88
      %p90 = scmp.ne.s32.totalorder %s81, %s82
      %p91 = scmp.eq.s32.totalorder %s29, 0
      %p92 = por %p90, %p91
      %p93 = scmp.ne.s32.totalorder %s81, %s82
      %p94 = scmp.eq.s32.totalorder %s30, 1
      %p95 = por %p93, %p94
      %p97 = scmp.ne.s32.totalorder %s82, %s96
      %p98 = scmp.eq.s32.totalorder %s30, 0
      %p99 = por %p97, %p98
      %s101 = sadd.s32 %s100, 1
      %p104 = scmp.eq.s32.totalorder %s24, 1
      %p105 = scmp.ne.s32.totalorder %s100, %s102
      %p106 = scmp.eq.s32.totalorder %s24, 0
      %p107 = por %p105, %p106
      %p108 = scmp.ne.s32.totalorder %s100, %s102
      %p109 = scmp.eq.s32.totalorder %s29, 1
      %p110 = por %p108, %p109
      %p111 = scmp.ne.s32.totalorder %s102, %s103
      %p112 = scmp.eq.s32.totalorder %s29, 0
      %p113 = por %p111, %p112
      %p114 = scmp.ne.s32.totalorder %s102, %s103
      %p115 = scmp.eq.s32.totalorder %s30, 1
      %p116 = por %p114, %p115
      %p118 = scmp.ne.s32.totalorder %s103, %s117
      %p119 = scmp.eq.s32.totalorder %s30, 0
      %p120 = por %p118, %p119
      %s122 = sadd.s32 %s121, 1
      %p125 = scmp.eq.s32.totalorder %s24, 1
      %p126 = scmp.ne.s32.totalorder %s121, %s123
      %p127 = scmp.eq.s32.totalorder %s24, 0
      %p128 = por %p126, %p127
      %p129 = scmp.ne.s32.totalorder %s121, %s123
      %p130 = scmp.eq.s32.totalorder %s29, 1
      %p131 = por %p129, %p130
      %p132 = scmp.ne.s32.totalorder %s123, %s124
      %p133 = scmp.eq.s32.totalorder %s29, 0
      %p134 = por %p132, %p133
      %p135 = scmp.ne.s32.totalorder %s123, %s124
      %p136 = scmp.eq.s32.totalorder %s30, 1
      %p137 = por %p135, %p136
      %p139 = scmp.ne.s32.totalorder %s124, %s138
      %p140 = scmp.eq.s32.totalorder %s30, 0
      %p141 = por %p139, %p140
      %s143 = sadd.s32 %s142, 1
      %p146 = scmp.eq.s32.totalorder %s24, 1
      %p147 = scmp.ne.s32.totalorder %s142, %s144
      %p148 = scmp.eq.s32.totalorder %s24, 0
      %p149 = por %p147, %p148
      %p150 = scmp.ne.s32.totalorder %s142, %s144
      %p151 = scmp.eq.s32.totalorder %s29, 1
      %p152 = por %p150, %p151
      %p153 = scmp.ne.s32.totalorder %s144, %s145
      %p154 = scmp.eq.s32.totalorder %s29, 0
      %p155 = por %p153, %p154
      %p156 = scmp.ne.s32.totalorder %s144, %s145
      %p157 = scmp.eq.s32.totalorder %s30, 1
      %p158 = por %p156, %p157
      %p160 = scmp.ne.s32.totalorder %s145, %s159
      %p161 = scmp.eq.s32.totalorder %s30, 0
      %p162 = por %p160, %p161
      %s164 = sadd.s32 %s163, 1
      %p167 = scmp.eq.s32.totalorder %s24, 1
      %p168 = scmp.ne.s32.totalorder %s163, %s165
      %p169 = scmp.eq.s32.totalorder %s24, 0
      %p170 = por %p168, %p169
      %p171 = scmp.ne.s32.totalorder %s163, %s165
      %p172 = scmp.eq.s32.totalorder %s29, 1
      %p173 = por %p171, %p172
      %p174 = scmp.ne.s32.totalorder %s165, %s166
      %p175 = scmp.eq.s32.totalorder %s29, 0
      %p176 = por %p174, %p175
      %p177 = scmp.ne.s32.totalorder %s165, %s166
      %p178 = scmp.eq.s32.totalorder %s30, 1
      %p179 = por %p177, %p178
      %p181 = scmp.ne.s32.totalorder %s166, %s180
      %p182 = scmp.eq.s32.totalorder %s30, 0
      %p183 = por %p181, %p182
      %s185 = sadd.s32 %s184, 1
      %p188 = scmp.eq.s32.totalorder %s24, 1
      %p189 = scmp.ne.s32.totalorder %s184, %s186
      %p190 = scmp.eq.s32.totalorder %s24, 0
      %p191 = por %p189, %p190
      %p192 = scmp.ne.s32.totalorder %s184, %s186
      %p193 = scmp.eq.s32.totalorder %s29, 1
      %p194 = por %p192, %p193
      %p195 = scmp.ne.s32.totalorder %s186, %s187
      %p196 = scmp.eq.s32.totalorder %s29, 0
      %p197 = por %p195, %p196
      %p198 = scmp.ne.s32.totalorder %s186, %s187
      %p199 = scmp.eq.s32.totalorder %s30, 1
      %p200 = por %p198, %p199
      %p202 = scmp.ne.s32.totalorder %s187, %s201
      %p203 = scmp.eq.s32.totalorder %s30, 0
      %p204 = por %p202, %p203
      %s206 = sadd.s32 %s205, 1
      %p209 = scmp.eq.s32.totalorder %s24, 1
      %p210 = scmp.ne.s32.totalorder %s205, %s207
      %p211 = scmp.eq.s32.totalorder %s24, 0
      %p212 = por %p210, %p211
      %p213 = scmp.ne.s32.totalorder %s205, %s207
      %p214 = scmp.eq.s32.totalorder %s29, 1
      %p215 = por %p213, %p214
      %p216 = scmp.ne.s32.totalorder %s207, %s208
      %p217 = scmp.eq.s32.totalorder %s29, 0
      %p218 = por %p216, %p217
      %p219 = scmp.ne.s32.totalorder %s207, %s208
      %p220 = scmp.eq.s32.totalorder %s30, 1
      %p221 = por %p219, %p220
      %p223 = scmp.ne.s32.totalorder %s208, %s222
      %p224 = scmp.eq.s32.totalorder %s30, 0
      %p225 = por %p223, %p224
      %s227 = sadd.s32 %s226, 1
      %p230 = scmp.eq.s32.totalorder %s24, 1
      %p231 = scmp.ne.s32.totalorder %s226, %s228
      %p232 = scmp.eq.s32.totalorder %s24, 0
      %p233 = por %p231, %p232
      %p234 = scmp.ne.s32.totalorder %s226, %s228
      %p235 = scmp.eq.s32.totalorder %s29, 1
      %p236 = por %p234, %p235
      %p237 = scmp.ne.s32.totalorder %s228, %s229
      %p238 = scmp.eq.s32.totalorder %s29, 0
      %p239 = por %p237, %p238
      %p240 = scmp.ne.s32.totalorder %s228, %s229
      %p241 = scmp.eq.s32.totalorder %s30, 1
      %p242 = por %p240, %p241
      %p244 = scmp.ne.s32.totalorder %s229, %s243
      %p245 = scmp.eq.s32.totalorder %s30, 0
      %p246 = por %p244, %p245
      %s248 = sadd.s32 %s247, 1
      %p251 = scmp.eq.s32.totalorder %s24, 1
      %p252 = scmp.ne.s32.totalorder %s247, %s249
      %p253 = scmp.eq.s32.totalorder %s24, 0
      %p254 = por %p252, %p253
      %p255 = scmp.ne.s32.totalorder %s247, %s249
      %p256 = scmp.eq.s32.totalorder %s29, 1
      %p257 = por %p255, %p256
      %p258 = scmp.ne.s32.totalorder %s249, %s250
      %p259 = scmp.eq.s32.totalorder %s29, 0
      %p260 = por %p258, %p259
      %p261 = scmp.ne.s32.totalorder %s249, %s250
      %p262 = scmp.eq.s32.totalorder %s30, 1
      %p263 = por %p261, %p262
      %p265 = scmp.ne.s32.totalorder %s250, %s264
      %p266 = scmp.eq.s32.totalorder %s30, 0
      %p267 = por %p265, %p266
      %s269 = sadd.s32 %s268, 1
      %p272 = scmp.eq.s32.totalorder %s24, 1
      %p273 = scmp.ne.s32.totalorder %s268, %s270
      %p274 = scmp.eq.s32.totalorder %s24, 0
      %p275 = por %p273, %p274
      %p276 = scmp.ne.s32.totalorder %s268, %s270
      %p277 = scmp.eq.s32.totalorder %s29, 1
      %p278 = por %p276, %p277
      %p279 = scmp.ne.s32.totalorder %s270, %s271
      %p280 = scmp.eq.s32.totalorder %s29, 0
      %p281 = por %p279, %p280
      %p282 = scmp.ne.s32.totalorder %s270, %s271
      %p283 = scmp.eq.s32.totalorder %s30, 1
      %p284 = por %p282, %p283
      %p286 = scmp.ne.s32.totalorder %s271, %s285
      %p287 = scmp.eq.s32.totalorder %s30, 0
      %p288 = por %p286, %p287
      %s290 = sadd.s32 %s289, 1
      %p293 = scmp.eq.s32.totalorder %s24, 1
      %p294 = scmp.ne.s32.totalorder %s289, %s291
      %p295 = scmp.eq.s32.totalorder %s24, 0
      %p296 = por %p294, %p295
      %p297 = scmp.ne.s32.totalorder %s289, %s291
      %p298 = scmp.eq.s32.totalorder %s29, 1
      %p299 = por %p297, %p298
      %p300 = scmp.ne.s32.totalorder %s291, %s292
      %p301 = scmp.eq.s32.totalorder %s29, 0
      %p302 = por %p300, %p301
      %p303 = scmp.ne.s32.totalorder %s291, %s292
      %p304 = scmp.eq.s32.totalorder %s30, 1
      %p305 = por %p303, %p304
      %p307 = scmp.ne.s32.totalorder %s292, %s306
      %p308 = scmp.eq.s32.totalorder %s30, 0
      %p309 = por %p307, %p308
      %s311 = sadd.s32 %s310, 1
      %p314 = scmp.eq.s32.totalorder %s24, 1
      %p315 = scmp.ne.s32.totalorder %s310, %s312
      %p316 = scmp.eq.s32.totalorder %s24, 0
      %p317 = por %p315, %p316
      %p318 = scmp.ne.s32.totalorder %s310, %s312
      %p319 = scmp.eq.s32.totalorder %s29, 1
      %p320 = por %p318, %p319
      %p321 = scmp.ne.s32.totalorder %s312, %s313
      %p322 = scmp.eq.s32.totalorder %s29, 0
      %p323 = por %p321, %p322
      %p324 = scmp.ne.s32.totalorder %s312, %s313
      %p325 = scmp.eq.s32.totalorder %s30, 1
      %p326 = por %p324, %p325
      %p328 = scmp.ne.s32.totalorder %s313, %s327
      %p329 = scmp.eq.s32.totalorder %s30, 0
      %p330 = por %p328, %p329
      %s332 = sadd.s32 %s331, 1
      %p335 = scmp.eq.s32.totalorder %s24, 1
      %p336 = scmp.ne.s32.totalorder %s331, %s333
      %p337 = scmp.eq.s32.totalorder %s24, 0
      %p338 = por %p336, %p337
      %p339 = scmp.ne.s32.totalorder %s331, %s333
      %p340 = scmp.eq.s32.totalorder %s29, 1
      %p341 = por %p339, %p340
      %p342 = scmp.ne.s32.totalorder %s333, %s334
      %p343 = scmp.eq.s32.totalorder %s29, 0
      %p344 = por %p342, %p343
      %p345 = scmp.ne.s32.totalorder %s333, %s334
      %p346 = scmp.eq.s32.totalorder %s30, 1
      %p347 = por %p345, %p346
      %p349 = scmp.ne.s32.totalorder %s334, %s348
      %p350 = scmp.eq.s32.totalorder %s30, 0
      %p351 = por %p349, %p350
      %s352 = ssub.s32 %s24, %s31
      %p353 = scmp.eq.s32.totalorder %s352, 0
      %s355 = sadd.s32 %s354, 1
      %s356 = scalar_select %p353, %s354, %s355
      %p359 = pneg %p353
      %p360 = scmp.eq.s32.totalorder %s24, 1
      %p361 = por %p359, %p360
      %p362 = scmp.ne.s32.totalorder %s354, %s357
      %p363 = scmp.eq.s32.totalorder %s24, 0
      %p364 = por %p362, %p363
      %p365 = scmp.ne.s32.totalorder %s354, %s357
      %p366 = scmp.eq.s32.totalorder %s29, 1
      %p367 = por %p365, %p366
      %p368 = scmp.ne.s32.totalorder %s357, %s358
      %p369 = scmp.eq.s32.totalorder %s29, 0
      %p370 = por %p368, %p369
      %p371 = scmp.ne.s32.totalorder %s357, %s358
      %p372 = scmp.eq.s32.totalorder %s30, 1
      %p373 = por %p371, %p372
      %p375 = scmp.ne.s32.totalorder %s358, %s374
      %p376 = scmp.eq.s32.totalorder %s30, 0
      %p377 = por %p375, %p376
      %p378 = scmp.le.s32.totalorder 1, %s24
      %p379 = scmp.lt.s32.totalorder %s24, 3
      %p380 = pnand %p378, %p379
      %p381 = pneg %p380
      // Predicated region
      $region9: #{forward.1} parent=5 // pred_check
        _
      $region10: #{forward.1} parent=5 // pred_check_branch
        %383 = sbr.rel (%p380) target = $region12
      $region11: #{forward.1} parent=5 // pred_region
        %s384 = ssub.s32 %s24, 1
        // Predicated region
        $region13: #{forward.1} parent=11 // pred_check
          %p385 = pneg %p71
        $region14: #{forward.1} parent=11 // pred_check_branch
          %387 = sbr.rel (%p385) target = $region16
        $region15: #{forward.1} parent=11 // pred_region
          %s389 = ssub.s32 16, 16
          %390 = vsyncadd [#allocation4], %s389
          %s392 = sshll.u32 [#allocation3], 4
          %s393 = int_to_ptr.vmem [resolvable:$true] %s392
          %395 = dma.hbm_to_vmem [thread:$0]  %s1, 16, %s393, [#allocation4]
        $region16: #{forward.1} parent=11 // pred_fallthru
          _
        // Predicated region
        $region17: #{forward.1} parent=11 // pred_check
          %p396 = pneg %p92
        $region18: #{forward.1} parent=11 // pred_check_branch
          %398 = sbr.rel (%p396) target = $region20
        $region19: #{forward.1} parent=11 // pred_region
          _
        $region20: #{forward.1} parent=11 // pred_fallthru
          _
        // Predicated region
        $region21: #{forward.1} parent=11 // pred_check
          %p399 = pneg %p113
        $region22: #{forward.1} parent=11 // pred_check_branch
          %401 = sbr.rel (%p399) target = $region24
        $region23: #{forward.1} parent=11 // pred_region
          _
        $region24: #{forward.1} parent=11 // pred_fallthru
          _
        // Predicated region
        $region25: #{forward.1} parent=11 // pred_check
          %p402 = pneg %p134
        $region26: #{forward.1} parent=11 // pred_check_branch
          %404 = sbr.rel (%p402) target = $region28
        $region27: #{forward.1} parent=11 // pred_region
          _
        $region28: #{forward.1} parent=11 // pred_fallthru
          _
        // Predicated region
        $region29: #{forward.1} parent=11 // pred_check
          %p405 = pneg %p155
        $region30: #{forward.1} parent=11 // pred_check_branch
          %407 = sbr.rel (%p405) target = $region32
        $region31: #{forward.1} parent=11 // pred_region
          %s409 = ssub.s32 512, 512
          %410 = vsyncadd [#allocation6], %s409
          %s411 = sshll.u32 [#allocation5], 4
          %s412 = int_to_ptr.vmem [resolvable:$true] %s411
          %417 = dma.hbm_to_vmem [thread:$0]  %s5, 512, %s412, [#allocation6], 128, 128, 8
        $region32: #{forward.1} parent=11 // pred_fallthru
          _
        // Predicated region
        $region33: #{forward.1} parent=11 // pred_check
          %p418 = pneg %p176
        $region34: #{forward.1} parent=11 // pred_check_branch
          %420 = sbr.rel (%p418) target = $region36
        $region35: #{forward.1} parent=11 // pred_region
          _
        $region36: #{forward.1} parent=11 // pred_fallthru
          _
        // Predicated region
        $region37: #{forward.1} parent=11 // pred_check
          %p421 = pneg %p197
        $region38: #{forward.1} parent=11 // pred_check_branch
          %423 = sbr.rel (%p421) target = $region40
        $region39: #{forward.1} parent=11 // pred_region
          _
        $region40: #{forward.1} parent=11 // pred_fallthru
          _
        // Predicated region
        $region41: #{forward.1} parent=11 // pred_check
          %p424 = pneg %p218
        $region42: #{forward.1} parent=11 // pred_check_branch
          %426 = sbr.rel (%p424) target = $region44
        $region43: #{forward.1} parent=11 // pred_region
          _
        $region44: #{forward.1} parent=11 // pred_fallthru
          _
        // Predicated region
        $region45: #{forward.1} parent=11 // pred_check
          %p427 = pneg %p239
        $region46: #{forward.1} parent=11 // pred_check_branch
          %429 = sbr.rel (%p427) target = $region48
        $region47: #{forward.1} parent=11 // pred_region
          _
        $region48: #{forward.1} parent=11 // pred_fallthru
          _
        // Predicated region
        $region49: #{forward.1} parent=11 // pred_check
          %p430 = pneg %p260
        $region50: #{forward.1} parent=11 // pred_check_branch
          %432 = sbr.rel (%p430) target = $region52
        $region51: #{forward.1} parent=11 // pred_region
          %s434 = ssub.s32 2048, 2048
          %435 = vsyncadd [#allocation6], %s434
          %s436 = sshll.u32 [#allocation7], 4
          %s437 = int_to_ptr.vmem [resolvable:$true] %s436
          %442 = dma.hbm_to_vmem [thread:$0]  %s10, 2048, %s437, [#allocation6], 128, 128, 8
        $region52: #{forward.1} parent=11 // pred_fallthru
          _
        // Predicated region
        $region53: #{forward.1} parent=11 // pred_check
          %p443 = pneg %p281
        $region54: #{forward.1} parent=11 // pred_check_branch
          %445 = sbr.rel (%p443) target = $region56
        $region55: #{forward.1} parent=11 // pred_region
          _
        $region56: #{forward.1} parent=11 // pred_fallthru
          _
        // Predicated region
        $region57: #{forward.1} parent=11 // pred_check
          %p446 = pneg %p302
        $region58: #{forward.1} parent=11 // pred_check_branch
          %448 = sbr.rel (%p446) target = $region60
        $region59: #{forward.1} parent=11 // pred_region
          _
        $region60: #{forward.1} parent=11 // pred_fallthru
          _
        // Predicated region
        $region61: #{forward.1} parent=11 // pred_check
          %p449 = pneg %p323
        $region62: #{forward.1} parent=11 // pred_check_branch
          %451 = sbr.rel (%p449) target = $region64
        $region63: #{forward.1} parent=11 // pred_region
          _
        $region64: #{forward.1} parent=11 // pred_fallthru
          _
        // Predicated region
        $region65: #{forward.1} parent=11 // pred_check
          %p452 = pneg %p344
        $region66: #{forward.1} parent=11 // pred_check_branch
          %454 = sbr.rel (%p452) target = $region68
        $region67: #{forward.1} parent=11 // pred_region
          %s456 = ssub.s32 2048, 2048
          %457 = vsyncadd [#allocation9], %s456
          %s458 = sshll.u32 [#allocation8], 4
          %s459 = int_to_ptr.vmem [resolvable:$true] %s458
          %464 = dma.hbm_to_vmem [thread:$0]  %s14, 2048, %s459, [#allocation9], 128, 128, 8
        $region68: #{forward.1} parent=11 // pred_fallthru
          _
      $region12: #{forward.1} parent=5 // pred_fallthru
        _
      %p465 = scmp.lt.s32.totalorder %s24, 2
      // Predicated region
      $region69: #{forward.1} parent=5 // pred_check
        %p466 = pneg %p465
      $region70: #{forward.1} parent=5 // pred_check_branch
        %468 = sbr.rel (%p466) target = $region72
      $region71: #{forward.1} parent=5 // pred_region
        // Predicated region
        $region73: #{forward.1} parent=71 // pred_check
          %p469 = pneg %p44
        $region74: #{forward.1} parent=71 // pred_check_branch
          %471 = sbr.rel (%p469) target = $region76
        $region75: #{forward.1} parent=71 // pred_region
          %p472 = scmp.lt.s32.totalorder %s24, 1
          %s473 = scalar_select %p472, %s24, 1
          %s474 = smul.addr %s473, 2
          %s475 = smul.addr %s474, 8
          %s476 = scalar_lea.vmem %s0, %s475
        $region76: #{forward.1} parent=71 // pred_fallthru
          _
      $region72: #{forward.1} parent=5 // pred_fallthru
        _
      %p477 = scmp.le.s32.totalorder 1, %s24
      %p478 = scmp.lt.s32.totalorder %s24, 3
      %p479 = pnand %p477, %p478
      %p480 = pneg %p479
      // Predicated region
      $region77: #{forward.1} parent=5 // pred_check
        _
      $region78: #{forward.1} parent=5 // pred_check_branch
        %482 = sbr.rel (%p479) target = $region80
      $region79: #{forward.1} parent=5 // pred_region
        %s483 = ssub.s32 %s24, 1
        // Predicated region
        $region81: #{forward.1} parent=79 // pred_check
          %p484 = pneg %p71
        $region82: #{forward.1} parent=79 // pred_check_branch
          %486 = sbr.rel (%p484) target = $region84
        $region83: #{forward.1} parent=79 // pred_region
          %487 = dma.done [#allocation4], 16
        $region84: #{forward.1} parent=79 // pred_fallthru
          _
        // Predicated region
        $region85: #{forward.1} parent=79 // pred_check
          %p488 = pneg %p155
        $region86: #{forward.1} parent=79 // pred_check_branch
          %490 = sbr.rel (%p488) target = $region88
        $region87: #{forward.1} parent=79 // pred_region
          %491 = dma.done [#allocation6], 512
        $region88: #{forward.1} parent=79 // pred_fallthru
          _
        // Predicated region
        $region89: #{forward.1} parent=79 // pred_check
          %p492 = pneg %p260
        $region90: #{forward.1} parent=79 // pred_check_branch
          %494 = sbr.rel (%p492) target = $region92
        $region91: #{forward.1} parent=79 // pred_region
          %495 = dma.done [#allocation6], 2048
        $region92: #{forward.1} parent=79 // pred_fallthru
          _
        // Predicated region
        $region93: #{forward.1} parent=79 // pred_check
          %p496 = pneg %p344
        $region94: #{forward.1} parent=79 // pred_check_branch
          %498 = sbr.rel (%p496) target = $region96
        $region95: #{forward.1} parent=79 // pred_region
          %499 = dma.done [#allocation9], 2048
        $region96: #{forward.1} parent=79 // pred_fallthru
          _
        %p500 = scmp.lt.s32.totalorder %s29, 1
        %s501 = scalar_select %p500, %s29, 1
        %s502 = smul.addr %s501, 2
        %s503 = smul.addr %s502, 8
        %s504 = scalar_lea.vmem %s0, %s503
        %p505 = pneg %p50
        %p506 = pneg %p47
        %p507 = pneg %p71
        %p508 = pneg %p68
        %p509 = pneg %p92
        %p510 = pneg %p89
        %p511 = pneg %p113
        %p512 = pneg %p110
        %p513 = pneg %p134
        %p514 = pneg %p131
        %p515 = pneg %p155
        %p516 = pneg %p152
        %p517 = pneg %p176
        %p518 = pneg %p173
        %p519 = pneg %p197
        %p520 = pneg %p194
        %p521 = pneg %p218
        %p522 = pneg %p215
        %p523 = pneg %p239
        %p524 = pneg %p236
        %p525 = pneg %p260
        %p526 = pneg %p257
        %p527 = pneg %p281
        %p528 = pneg %p278
        %p529 = pneg %p302
        %p530 = pneg %p299
        %p531 = pneg %p323
        %p532 = pneg %p320
        %p533 = pneg %p344
        %p534 = pneg %p341
        %p535 = pneg %p370
        %p536 = pneg %p367
        %p537 = scmp.lt.s32.totalorder %s29, 1
        %s538 = scalar_select %p537, %s29, 1
        %s539 = smul.addr %s538, 2
        %s540 = smul.addr %s539, 8
        %s541 = scalar_lea.vmem %s15, %s540
        %p542 = scmp.lt.s32.totalorder %s29, 1
        %s543 = scalar_select %p542, %s29, 1
        %s544 = smul.addr %s543, 2
        %s545 = smul.addr %s544, 8
        %s546 = scalar_lea.vmem %s0, %s545
        %p547 = scmp.lt.s32.totalorder %s29, 1
        %s548 = scalar_select %p547, %s29, 1
        %s549 = smul.addr %s548, 2
        %s550 = smul.addr %s549, 8
        %s551 = scalar_lea.vmem %s15, %s550
        %v552 = vld [vmem:[%s546] sm:$0xff]
        %v553 = vld [vmem:[%s546 + $0x8] sm:$0xff]
        %v554 = vld [vmem:[%s9] sm:$0xff]
        %v555 = vld [vmem:[%s9 + $0x8] sm:$0xff]
        %v556 = vld [vmem:[%s9 + $0x10] sm:$0xff]
        %v557 = vld [vmem:[%s9 + $0x18] sm:$0xff]
        %v558 = vld [vmem:[%s9 + $0x20] sm:$0xff]
        %v559 = vld [vmem:[%s9 + $0x28] sm:$0xff]
        %v560 = vld [vmem:[%s9 + $0x30] sm:$0xff]
        %v561 = vld [vmem:[%s9 + $0x38] sm:$0xff]
        %v562 = vld [vmem:[%s9 + $0x40] sm:$0xff]
        %v563 = vld [vmem:[%s9 + $0x48] sm:$0xff]
        %v564 = vld [vmem:[%s9 + $0x50] sm:$0xff]
        %v565 = vld [vmem:[%s9 + $0x58] sm:$0xff]
        %v566 = vld [vmem:[%s9 + $0x60] sm:$0xff]
        %v567 = vld [vmem:[%s9 + $0x68] sm:$0xff]
        %v568 = vld [vmem:[%s9 + $0x70] sm:$0xff]
        %v569 = vld [vmem:[%s9 + $0x78] sm:$0xff]
        %v570 = vld [vmem:[%s9 + $0x80] sm:$0xff]
        %v571 = vld [vmem:[%s9 + $0x88] sm:$0xff]
        %v572 = vld [vmem:[%s9 + $0x90] sm:$0xff]
        %v573 = vld [vmem:[%s9 + $0x98] sm:$0xff]
        %vm574 = vcmask 261120
        %v576 = vsel %vm574, %v552, 0
        %v579 = vsel %vm574, %v553, 0
        %581 = vmatprep.subr.mxu0 %v555
        %582 = vmatpush1.msra.mxu0 %v554
        %583 = vmatprep.subr.mxu0 %v560
        %584 = vmatpush1.msra.mxu0 %v559
        %585 = vmatprep.subr.mxu0 %v565
        %586 = vmatpush1.msra.mxu0 %v564
        %587 = vmatprep.subr.mxu0 %v570
        %588 = vmatpush1.msra.mxu0 %v569
        %589 = vmatprep.subr.mxu0 0.0
        %590 = vmatpush1.msra.mxu0 0.0
        %591 = vmatprep.subr.mxu0 0.0
        %592 = vmatpush1.msra.mxu0 0.0
        %593 = vmatprep.subr.mxu0 0.0
        %594 = vmatpush1.msra.mxu0 0.0
        %595 = vmatprep.subr.mxu0 0.0
        %596 = vmatpush1.msra.mxu0 0.0
        %597 = vmatprep.subr.mxu0 0.0
        %598 = vmatpush1.msra.mxu0 0.0
        %599 = vmatprep.subr.mxu0 0.0
        %600 = vmatpush1.msra.mxu0 0.0
        %601 = vmatprep.subr.mxu0 0.0
        %602 = vmatpush1.msra.mxu0 0.0
        %603 = vmatprep.subr.mxu0 0.0
        %604 = vmatpush1.msra.mxu0 0.0
        %605 = vmatprep.subr.mxu0 0.0
        %606 = vmatpush1.msra.mxu0 0.0
        %607 = vmatprep.subr.mxu0 0.0
        %608 = vmatpush1.msra.mxu0 0.0
        %609 = vmatprep.subr.mxu0 0.0
        %610 = vmatpush1.msra.mxu0 0.0
        %611 = vmatprep.subr.mxu0 0.0
        %612 = vmatpush1.msra.mxu0 0.0
        %613 = vmatprep.subr.mxu0 0.0
        %614 = vmatpush1.msra.mxu0 0.0
        %615 = vmatprep.subr.mxu0 0.0
        %616 = vmatpush1.msra.mxu0 0.0
        %617 = vmatprep.subr.mxu0 0.0
        %618 = vmatpush1.msra.mxu0 0.0
        %619 = vmatprep.subr.mxu0 0.0
        %620 = vmatpush1.msra.mxu0 0.0
        %621 = vmatprep.subr.mxu0 0.0
        %622 = vmatpush1.msra.mxu0 0.0
        %623 = vmatprep.subr.mxu0 0.0
        %624 = vmatpush1.msra.mxu0 0.0
        %625 = vmatprep.subr.mxu0 0.0
        %626 = vmatpush1.msra.mxu0 0.0
        %627 = vmatprep.subr.mxu0 0.0
        %628 = vmatpush1.msra.mxu0 0.0
        %629 = vmatprep.subr.mxu0 0.0
        %630 = vmatpush1.msra.mxu0 0.0
        %631 = vmatprep.subr.mxu0 0.0
        %632 = vmatpush1.msra.mxu0 0.0
        %633 = vmatprep.subr.mxu0 0.0
        %634 = vmatpush1.msra.mxu0 0.0
        %635 = vmatprep.subr.mxu0 0.0
        %636 = vmatpush1.msra.mxu0 0.0
        %637 = vmatprep.subr.mxu0 0.0
        %638 = vmatpush1.msra.mxu0 0.0
        %639 = vmatprep.subr.mxu0 0.0
        %640 = vmatpush1.msra.mxu0 0.0
        %641 = vmatprep.subr.mxu0 0.0
        %642 = vmatpush1.msra.mxu0 0.0
        %643 = vmatprep.subr.mxu0 0.0
        %644 = vmatpush1.msra.mxu0 0.0
        %645 = vmatprep.mubr.f32.mxu0 0.0
        %646 = vmatmul.mubr.f32.gmra.mrb[0].mxu0 %v576
        %v647 = vpop.f32.mrb[0].mxu0
        %v648 = vadd.f32 0.0, %v647
        %v649 = vpop.f32.mrb[0].mxu0
        %v650 = vadd.f32 0.0, %v649
        %651 = vmatprep.mubr.f32.mxu0 0.0
        %652 = vmatmul.mubr.f32.gmra.mrb[0].mxu0 %v579
        %v653 = vpop.f32.mrb[0].mxu0
        %v654 = vadd.f32 0.0, %v653
        %v655 = vpop.f32.mrb[0].mxu0
        %v656 = vadd.f32 0.0, %v655
        %657 = vdwg.mxu0
        %658 = vmatprep.subr.mxu0 %v557
        %659 = vmatpush1.msra.mxu0 %v556
        %660 = vmatprep.subr.mxu0 %v562
        %661 = vmatpush1.msra.mxu0 %v561
        %662 = vmatprep.subr.mxu0 %v567
        %663 = vmatpush1.msra.mxu0 %v566
        %664 = vmatprep.subr.mxu0 %v572
        %665 = vmatpush1.msra.mxu0 %v571
        %666 = vmatprep.subr.mxu0 0.0
        %667 = vmatpush1.msra.mxu0 0.0
        %668 = vmatprep.subr.mxu0 0.0
        %669 = vmatpush1.msra.mxu0 0.0
        %670 = vmatprep.subr.mxu0 0.0
        %671 = vmatpush1.msra.mxu0 0.0
        %672 = vmatprep.subr.mxu0 0.0
        %673 = vmatpush1.msra.mxu0 0.0
        %674 = vmatprep.subr.mxu0 0.0
        %675 = vmatpush1.msra.mxu0 0.0
        %676 = vmatprep.subr.mxu0 0.0
        %677 = vmatpush1.msra.mxu0 0.0
        %678 = vmatprep.subr.mxu0 0.0
        %679 = vmatpush1.msra.mxu0 0.0
        %680 = vmatprep.subr.mxu0 0.0
        %681 = vmatpush1.msra.mxu0 0.0
        %682 = vmatprep.subr.mxu0 0.0
        %683 = vmatpush1.msra.mxu0 0.0
        %684 = vmatprep.subr.mxu0 0.0
        %685 = vmatpush1.msra.mxu0 0.0
        %686 = vmatprep.subr.mxu0 0.0
        %687 = vmatpush1.msra.mxu0 0.0
        %688 = vmatprep.subr.mxu0 0.0
        %689 = vmatpush1.msra.mxu0 0.0
        %690 = vmatprep.subr.mxu0 0.0
        %691 = vmatpush1.msra.mxu0 0.0
        %692 = vmatprep.subr.mxu0 0.0
        %693 = vmatpush1.msra.mxu0 0.0
        %694 = vmatprep.subr.mxu0 0.0
        %695 = vmatpush1.msra.mxu0 0.0
        %696 = vmatprep.subr.mxu0 0.0
        %697 = vmatpush1.msra.mxu0 0.0
        %698 = vmatprep.subr.mxu0 0.0
        %699 = vmatpush1.msra.mxu0 0.0
        %700 = vmatprep.subr.mxu0 0.0
        %701 = vmatpush1.msra.mxu0 0.0
        %702 = vmatprep.subr.mxu0 0.0
        %703 = vmatpush1.msra.mxu0 0.0
        %704 = vmatprep.subr.mxu0 0.0
        %705 = vmatpush1.msra.mxu0 0.0
        %706 = vmatprep.subr.mxu0 0.0
        %707 = vmatpush1.msra.mxu0 0.0
        %708 = vmatprep.subr.mxu0 0.0
        %709 = vmatpush1.msra.mxu0 0.0
        %710 = vmatprep.subr.mxu0 0.0
        %711 = vmatpush1.msra.mxu0 0.0
        %712 = vmatprep.subr.mxu0 0.0
        %713 = vmatpush1.msra.mxu0 0.0
        %714 = vmatprep.subr.mxu0 0.0
        %715 = vmatpush1.msra.mxu0 0.0
        %716 = vmatprep.subr.mxu0 0.0
        %717 = vmatpush1.msra.mxu0 0.0
        %718 = vmatprep.subr.mxu0 0.0
        %719 = vmatpush1.msra.mxu0 0.0
        %720 = vmatprep.subr.mxu0 0.0
        %721 = vmatpush1.msra.mxu0 0.0
        %722 = vmatprep.mubr.f32.mxu0 0.0
        %723 = vmatmul.mubr.f32.gmra.mrb[0].mxu0 %v576
        %v724 = vpop.f32.mrb[0].mxu0
        %v725 = vadd.f32 0.0, %v724
        %v726 = vpop.f32.mrb[0].mxu0
        %v727 = vadd.f32 0.0, %v726
        %728 = vmatprep.mubr.f32.mxu0 0.0
        %729 = vmatmul.mubr.f32.gmra.mrb[0].mxu0 %v579
        %v730 = vpop.f32.mrb[0].mxu0
        %v731 = vadd.f32 0.0, %v730
        %v732 = vpop.f32.mrb[0].mxu0
        %v733 = vadd.f32 0.0, %v732
        %734 = vdwg.mxu0
        %735 = vmatprep.subr.mxu0 0.0
        %736 = vmatpush1.msra.mxu0 %v558
        %737 = vmatprep.subr.mxu0 0.0
        %738 = vmatpush1.msra.mxu0 %v563
        %739 = vmatprep.subr.mxu0 0.0
        %740 = vmatpush1.msra.mxu0 %v568
        %741 = vmatprep.subr.mxu0 0.0
        %742 = vmatpush1.msra.mxu0 %v573
        %743 = vmatprep.subr.mxu0 0.0
        %744 = vmatpush1.msra.mxu0 0.0
        %745 = vmatprep.subr.mxu0 0.0
        %746 = vmatpush1.msra.mxu0 0.0
        %747 = vmatprep.subr.mxu0 0.0
        %748 = vmatpush1.msra.mxu0 0.0
        %749 = vmatprep.subr.mxu0 0.0
        %750 = vmatpush1.msra.mxu0 0.0
        %751 = vmatprep.subr.mxu0 0.0
        %752 = vmatpush1.msra.mxu0 0.0
        %753 = vmatprep.subr.mxu0 0.0
        %754 = vmatpush1.msra.mxu0 0.0
        %755 = vmatprep.subr.mxu0 0.0
        %756 = vmatpush1.msra.mxu0 0.0
        %757 = vmatprep.subr.mxu0 0.0
        %758 = vmatpush1.msra.mxu0 0.0
        %759 = vmatprep.subr.mxu0 0.0
        %760 = vmatpush1.msra.mxu0 0.0
        %761 = vmatprep.subr.mxu0 0.0
        %762 = vmatpush1.msra.mxu0 0.0
        %763 = vmatprep.subr.mxu0 0.0
        %764 = vmatpush1.msra.mxu0 0.0
        %765 = vmatprep.subr.mxu0 0.0
        %766 = vmatpush1.msra.mxu0 0.0
        %767 = vmatprep.subr.mxu0 0.0
        %768 = vmatpush1.msra.mxu0 0.0
        %769 = vmatprep.subr.mxu0 0.0
        %770 = vmatpush1.msra.mxu0 0.0
        %771 = vmatprep.subr.mxu0 0.0
        %772 = vmatpush1.msra.mxu0 0.0
        %773 = vmatprep.subr.mxu0 0.0
        %774 = vmatpush1.msra.mxu0 0.0
        %775 = vmatprep.subr.mxu0 0.0
        %776 = vmatpush1.msra.mxu0 0.0
        %777 = vmatprep.subr.mxu0 0.0
        %778 = vmatpush1.msra.mxu0 0.0
        %779 = vmatprep.subr.mxu0 0.0
        %780 = vmatpush1.msra.mxu0 0.0
        %781 = vmatprep.subr.mxu0 0.0
        %782 = vmatpush1.msra.mxu0 0.0
        %783 = vmatprep.subr.mxu0 0.0
        %784 = vmatpush1.msra.mxu0 0.0
        %785 = vmatprep.subr.mxu0 0.0
        %786 = vmatpush1.msra.mxu0 0.0
        %787 = vmatprep.subr.mxu0 0.0
        %788 = vmatpush1.msra.mxu0 0.0
        %789 = vmatprep.subr.mxu0 0.0
        %790 = vmatpush1.msra.mxu0 0.0
        %791 = vmatprep.subr.mxu0 0.0
        %792 = vmatpush1.msra.mxu0 0.0
        %793 = vmatprep.subr.mxu0 0.0
        %794 = vmatpush1.msra.mxu0 0.0
        %795 = vmatprep.subr.mxu0 0.0
        %796 = vmatpush1.msra.mxu0 0.0
        %797 = vmatprep.subr.mxu0 0.0
        %798 = vmatpush1.msra.mxu0 0.0
        %799 = vmatprep.mubr.f32.mxu0 0.0
        %800 = vmatmul.mubr.f32.gmra.mrb[0].mxu0 %v576
        %v801 = vpop.f32.mrb[0].mxu0
        %v802 = vadd.f32 0.0, %v801
        %v803 = vpop.f32.mrb[0].mxu0
        %804 = vmatprep.mubr.f32.mxu0 0.0
        %805 = vmatmul.mubr.f32.gmra.mrb[0].mxu0 %v579
        %v806 = vpop.f32.mrb[0].mxu0
        %v807 = vadd.f32 0.0, %v806
        %v808 = vpop.f32.mrb[0].mxu0
        %809 = vdwg.mxu0
        %v810 = vld [vmem:[#allocation3] sm:$0x1]
        %vm811 = vcmask 130048
        %v813 = vsel %vm811, %v810, 0
        %815 = vmatprep.subr.mxu0 0.0
        %816 = vmatpush1.msra.mxu0 %v552
        %817 = vmatprep.subr.mxu0 0.0
        %818 = vmatpush1.msra.mxu0 %v553
        %819 = vmatprep.subr.mxu0 0.0
        %820 = vmatpush1.msra.mxu0 0.0
        %821 = vmatprep.subr.mxu0 0.0
        %822 = vmatpush1.msra.mxu0 0.0
        %823 = vmatprep.subr.mxu0 0.0
        %824 = vmatpush1.msra.mxu0 0.0
        %825 = vmatprep.subr.mxu0 0.0
        %826 = vmatpush1.msra.mxu0 0.0
        %827 = vmatprep.subr.mxu0 0.0
        %828 = vmatpush1.msra.mxu0 0.0
        %829 = vmatprep.subr.mxu0 0.0
        %830 = vmatpush1.msra.mxu0 0.0
        %831 = vmatprep.subr.mxu0 0.0
        %832 = vmatpush1.msra.mxu0 0.0
        %833 = vmatprep.subr.mxu0 0.0
        %834 = vmatpush1.msra.mxu0 0.0
        %835 = vmatprep.subr.mxu0 0.0
        %836 = vmatpush1.msra.mxu0 0.0
        %837 = vmatprep.subr.mxu0 0.0
        %838 = vmatpush1.msra.mxu0 0.0
        %839 = vmatprep.subr.mxu0 0.0
        %840 = vmatpush1.msra.mxu0 0.0
        %841 = vmatprep.subr.mxu0 0.0
        %842 = vmatpush1.msra.mxu0 0.0
        %843 = vmatprep.subr.mxu0 0.0
        %844 = vmatpush1.msra.mxu0 0.0
        %845 = vmatprep.subr.mxu0 0.0
        %846 = vmatpush1.msra.mxu0 0.0
        %847 = vmatprep.subr.mxu0 0.0
        %848 = vmatpush1.msra.mxu0 0.0
        %849 = vmatprep.subr.mxu0 0.0
        %850 = vmatpush1.msra.mxu0 0.0
        %851 = vmatprep.subr.mxu0 0.0
        %852 = vmatpush1.msra.mxu0 0.0
        %853 = vmatprep.subr.mxu0 0.0
        %854 = vmatpush1.msra.mxu0 0.0
        %855 = vmatprep.subr.mxu0 0.0
        %856 = vmatpush1.msra.mxu0 0.0
        %857 = vmatprep.subr.mxu0 0.0
        %858 = vmatpush1.msra.mxu0 0.0
        %859 = vmatprep.subr.mxu0 0.0
        %860 = vmatpush1.msra.mxu0 0.0
        %861 = vmatprep.subr.mxu0 0.0
        %862 = vmatpush1.msra.mxu0 0.0
        %863 = vmatprep.subr.mxu0 0.0
        %864 = vmatpush1.msra.mxu0 0.0
        %865 = vmatprep.subr.mxu0 0.0
        %866 = vmatpush1.msra.mxu0 0.0
        %867 = vmatprep.subr.mxu0 0.0
        %868 = vmatpush1.msra.mxu0 0.0
        %869 = vmatprep.subr.mxu0 0.0
        %870 = vmatpush1.msra.mxu0 0.0
        %871 = vmatprep.subr.mxu0 0.0
        %872 = vmatpush1.msra.mxu0 0.0
        %873 = vmatprep.subr.mxu0 0.0
        %874 = vmatpush1.msra.mxu0 0.0
        %875 = vmatprep.subr.mxu0 0.0
        %876 = vmatpush1.msra.mxu0 0.0
        %877 = vmatprep.subr.mxu0 0.0
        %878 = vmatpush1.msra.mxu0 0.0
        %879 = vmatprep.mubr.f32.mxu0 0.0
        %880 = vmatmul.mubr.f32.gmra.mrb[0].mxu0 %v813
        %v881 = vpop.f32.mrb[0].mxu0
        %v882 = vadd.f32 0.0, %v881
        %v883 = vpop.f32.mrb[0].mxu0
        %884 = vdwg.mxu0
        %v885 = vld [vmem:[%s4] sm:$0xff]
        %v886 = vlaneseq
        %v887 = vshrl.u32 %v886, 7
        %v888 = vsub.s32 0, %v887
        %v889 = vrot.slane %v882, %v888
        %v890 = vmul.f32 %v885, %v889
        %v891 = vld [vmem:[%s6] sm:$0xff]
        %v892 = vld [vmem:[%s6 + $0x8] sm:$0xff]
        %v893 = vld [vmem:[%s6 + $0x10] sm:$0xff]
        %v894 = vld [vmem:[%s6 + $0x18] sm:$0xff]
        %v896 = vsel %vm574, %v890, 0
        %898 = vmatprep.subr.mxu0 0.0
        %899 = vmatpush1.msra.mxu0 %v891
        %900 = vmatprep.subr.mxu0 0.0
        %901 = vmatpush1.msra.mxu0 %v892
        %902 = vmatprep.subr.mxu0 0.0
        %903 = vmatpush1.msra.mxu0 %v893
        %904 = vmatprep.subr.mxu0 0.0
        %905 = vmatpush1.msra.mxu0 %v894
        %906 = vmatprep.subr.mxu0 0.0
        %907 = vmatpush1.msra.mxu0 0.0
        %908 = vmatprep.subr.mxu0 0.0
        %909 = vmatpush1.msra.mxu0 0.0
        %910 = vmatprep.subr.mxu0 0.0
        %911 = vmatpush1.msra.mxu0 0.0
        %912 = vmatprep.subr.mxu0 0.0
        %913 = vmatpush1.msra.mxu0 0.0
        %914 = vmatprep.subr.mxu0 0.0
        %915 = vmatpush1.msra.mxu0 0.0
        %916 = vmatprep.subr.mxu0 0.0
        %917 = vmatpush1.msra.mxu0 0.0
        %918 = vmatprep.subr.mxu0 0.0
        %919 = vmatpush1.msra.mxu0 0.0
        %920 = vmatprep.subr.mxu0 0.0
        %921 = vmatpush1.msra.mxu0 0.0
        %922 = vmatprep.subr.mxu0 0.0
        %923 = vmatpush1.msra.mxu0 0.0
        %924 = vmatprep.subr.mxu0 0.0
        %925 = vmatpush1.msra.mxu0 0.0
        %926 = vmatprep.subr.mxu0 0.0
        %927 = vmatpush1.msra.mxu0 0.0
        %928 = vmatprep.subr.mxu0 0.0
        %929 = vmatpush1.msra.mxu0 0.0
        %930 = vmatprep.subr.mxu0 0.0
        %931 = vmatpush1.msra.mxu0 0.0
        %932 = vmatprep.subr.mxu0 0.0
        %933 = vmatpush1.msra.mxu0 0.0
        %934 = vmatprep.subr.mxu0 0.0
        %935 = vmatpush1.msra.mxu0 0.0
        %936 = vmatprep.subr.mxu0 0.0
        %937 = vmatpush1.msra.mxu0 0.0
        %938 = vmatprep.subr.mxu0 0.0
        %939 = vmatpush1.msra.mxu0 0.0
        %940 = vmatprep.subr.mxu0 0.0
        %941 = vmatpush1.msra.mxu0 0.0
        %942 = vmatprep.subr.mxu0 0.0
        %943 = vmatpush1.msra.mxu0 0.0
        %944 = vmatprep.subr.mxu0 0.0
        %945 = vmatpush1.msra.mxu0 0.0
        %946 = vmatprep.subr.mxu0 0.0
        %947 = vmatpush1.msra.mxu0 0.0
        %948 = vmatprep.subr.mxu0 0.0
        %949 = vmatpush1.msra.mxu0 0.0
        %950 = vmatprep.subr.mxu0 0.0
        %951 = vmatpush1.msra.mxu0 0.0
        %952 = vmatprep.subr.mxu0 0.0
        %953 = vmatpush1.msra.mxu0 0.0
        %954 = vmatprep.subr.mxu0 0.0
        %955 = vmatpush1.msra.mxu0 0.0
        %956 = vmatprep.subr.mxu0 0.0
        %957 = vmatpush1.msra.mxu0 0.0
        %958 = vmatprep.subr.mxu0 0.0
        %959 = vmatpush1.msra.mxu0 0.0
        %960 = vmatprep.subr.mxu0 0.0
        %961 = vmatpush1.msra.mxu0 0.0
        %962 = vmatprep.mubr.f32.mxu0 0.0
        %963 = vmatmul.mubr.f32.gmra.mrb[0].mxu0 %v896
        %v964 = vpop.f32.mrb[0].mxu0
        %v965 = vadd.f32 0.0, %v964
        %v966 = vpop.f32.mrb[0].mxu0
        %967 = vdwg.mxu0
        %v968 = vld [vmem:[%s2] sm:$0xf]
        %v970 = vsel %vm811, %v968, 0
        %972 = vmatprep.subr.mxu0 0.0
        %973 = vmatpush1.msra.mxu0 %v802
        %974 = vmatprep.subr.mxu0 0.0
        %975 = vmatpush1.msra.mxu0 %v807
        %976 = vmatprep.subr.mxu0 0.0
        %977 = vmatpush1.msra.mxu0 0.0
        %978 = vmatprep.subr.mxu0 0.0
        %979 = vmatpush1.msra.mxu0 0.0
        %980 = vmatprep.subr.mxu0 0.0
        %981 = vmatpush1.msra.mxu0 0.0
        %982 = vmatprep.subr.mxu0 0.0
        %983 = vmatpush1.msra.mxu0 0.0
        %984 = vmatprep.subr.mxu0 0.0
        %985 = vmatpush1.msra.mxu0 0.0
        %986 = vmatprep.subr.mxu0 0.0
        %987 = vmatpush1.msra.mxu0 0.0
        %988 = vmatprep.subr.mxu0 0.0
        %989 = vmatpush1.msra.mxu0 0.0
        %990 = vmatprep.subr.mxu0 0.0
        %991 = vmatpush1.msra.mxu0 0.0
        %992 = vmatprep.subr.mxu0 0.0
        %993 = vmatpush1.msra.mxu0 0.0
        %994 = vmatprep.subr.mxu0 0.0
        %995 = vmatpush1.msra.mxu0 0.0
        %996 = vmatprep.subr.mxu0 0.0
        %997 = vmatpush1.msra.mxu0 0.0
        %998 = vmatprep.subr.mxu0 0.0
        %999 = vmatpush1.msra.mxu0 0.0
        %1000 = vmatprep.subr.mxu0 0.0
        %1001 = vmatpush1.msra.mxu0 0.0
        %1002 = vmatprep.subr.mxu0 0.0
        %1003 = vmatpush1.msra.mxu0 0.0
        %1004 = vmatprep.subr.mxu0 0.0
        %1005 = vmatpush1.msra.mxu0 0.0
        %1006 = vmatprep.subr.mxu0 0.0
        %1007 = vmatpush1.msra.mxu0 0.0
        %1008 = vmatprep.subr.mxu0 0.0
        %1009 = vmatpush1.msra.mxu0 0.0
        %1010 = vmatprep.subr.mxu0 0.0
        %1011 = vmatpush1.msra.mxu0 0.0
        %1012 = vmatprep.subr.mxu0 0.0
        %1013 = vmatpush1.msra.mxu0 0.0
        %1014 = vmatprep.subr.mxu0 0.0
        %1015 = vmatpush1.msra.mxu0 0.0
        %1016 = vmatprep.subr.mxu0 0.0
        %1017 = vmatpush1.msra.mxu0 0.0
        %1018 = vmatprep.subr.mxu0 0.0
        %1019 = vmatpush1.msra.mxu0 0.0
        %1020 = vmatprep.subr.mxu0 0.0
        %1021 = vmatpush1.msra.mxu0 0.0
        %1022 = vmatprep.subr.mxu0 0.0
        %1023 = vmatpush1.msra.mxu0 0.0
        %1024 = vmatprep.subr.mxu0 0.0
        %1025 = vmatpush1.msra.mxu0 0.0
        %1026 = vmatprep.subr.mxu0 0.0
        %1027 = vmatpush1.msra.mxu0 0.0
        %1028 = vmatprep.subr.mxu0 0.0
        %1029 = vmatpush1.msra.mxu0 0.0
        %1030 = vmatprep.subr.mxu0 0.0
        %1031 = vmatpush1.msra.mxu0 0.0
        %1032 = vmatprep.subr.mxu0 0.0
        %1033 = vmatpush1.msra.mxu0 0.0
        %1034 = vmatprep.subr.mxu0 0.0
        %1035 = vmatpush1.msra.mxu0 0.0
        %1036 = vmatprep.mubr.f32.mxu0 0.0
        %1037 = vmatmul.mubr.f32.gmra.mrb[0].mxu0 %v970
        %v1038 = vpop.f32.mrb[0].mxu0
        %v1039 = vadd.f32 0.0, %v1038
        %v1040 = vpop.f32.mrb[0].mxu0
        %1041 = vdwg.mxu0
        %vm1042 = vcmask 31744
        %v1044 = vsel %vm1042, %v965, 0
        %vm1046 = vcmask 1043456
        %v1048 = vsel %vm1046, %v1039, 0
        %1050 = vmatprep.subr.mxu0 0.0
        %1051 = vmatpush1.msra.mxu0 %v1048
        %1052 = vmatprep.subr.mxu0 0.0
        %1053 = vmatpush1.msra.mxu0 0.0
        %1054 = vmatprep.subr.mxu0 0.0
        %1055 = vmatpush1.msra.mxu0 0.0
        %1056 = vmatprep.subr.mxu0 0.0
        %1057 = vmatpush1.msra.mxu0 0.0
        %1058 = vmatprep.subr.mxu0 0.0
        %1059 = vmatpush1.msra.mxu0 0.0
        %1060 = vmatprep.subr.mxu0 0.0
        %1061 = vmatpush1.msra.mxu0 0.0
        %1062 = vmatprep.subr.mxu0 0.0
        %1063 = vmatpush1.msra.mxu0 0.0
        %1064 = vmatprep.subr.mxu0 0.0
        %1065 = vmatpush1.msra.mxu0 0.0
        %1066 = vmatprep.subr.mxu0 0.0
        %1067 = vmatpush1.msra.mxu0 0.0
        %1068 = vmatprep.subr.mxu0 0.0
        %1069 = vmatpush1.msra.mxu0 0.0
        %1070 = vmatprep.subr.mxu0 0.0
        %1071 = vmatpush1.msra.mxu0 0.0
        %1072 = vmatprep.subr.mxu0 0.0
        %1073 = vmatpush1.msra.mxu0 0.0
        %1074 = vmatprep.subr.mxu0 0.0
        %1075 = vmatpush1.msra.mxu0 0.0
        %1076 = vmatprep.subr.mxu0 0.0
        %1077 = vmatpush1.msra.mxu0 0.0
        %1078 = vmatprep.subr.mxu0 0.0
        %1079 = vmatpush1.msra.mxu0 0.0
        %1080 = vmatprep.subr.mxu0 0.0
        %1081 = vmatpush1.msra.mxu0 0.0
        %1082 = vmatprep.subr.mxu0 0.0
        %1083 = vmatpush1.msra.mxu0 0.0
        %1084 = vmatprep.subr.mxu0 0.0
        %1085 = vmatpush1.msra.mxu0 0.0
        %1086 = vmatprep.subr.mxu0 0.0
        %1087 = vmatpush1.msra.mxu0 0.0
        %1088 = vmatprep.subr.mxu0 0.0
        %1089 = vmatpush1.msra.mxu0 0.0
        %1090 = vmatprep.subr.mxu0 0.0
        %1091 = vmatpush1.msra.mxu0 0.0
        %1092 = vmatprep.subr.mxu0 0.0
        %1093 = vmatpush1.msra.mxu0 0.0
        %1094 = vmatprep.subr.mxu0 0.0
        %1095 = vmatpush1.msra.mxu0 0.0
        %1096 = vmatprep.subr.mxu0 0.0
        %1097 = vmatpush1.msra.mxu0 0.0
        %1098 = vmatprep.subr.mxu0 0.0
        %1099 = vmatpush1.msra.mxu0 0.0
        %1100 = vmatprep.subr.mxu0 0.0
        %1101 = vmatpush1.msra.mxu0 0.0
        %1102 = vmatprep.subr.mxu0 0.0
        %1103 = vmatpush1.msra.mxu0 0.0
        %1104 = vmatprep.subr.mxu0 0.0
        %1105 = vmatpush1.msra.mxu0 0.0
        %1106 = vmatprep.subr.mxu0 0.0
        %1107 = vmatpush1.msra.mxu0 0.0
        %1108 = vmatprep.subr.mxu0 0.0
        %1109 = vmatpush1.msra.mxu0 0.0
        %1110 = vmatprep.subr.mxu0 0.0
        %1111 = vmatpush1.msra.mxu0 0.0
        %1112 = vmatprep.subr.mxu0 0.0
        %1113 = vmatpush1.msra.mxu0 0.0
        %1114 = vmatprep.mubr.f32.mxu0 0.0
        %1115 = vmatmul.mubr.f32.gmra.mrb[0].mxu0 %v1044
        %v1116 = vpop.f32.mrb[0].mxu0
        %v1117 = vadd.f32 0.0, %v1116
        %v1118 = vpop.f32.mrb[0].mxu0
        %1119 = vdwg.mxu0
        %vm1120 = vcmask 64512
        %v1121 = vsel %vm1120, %v1117, -inf
        %v1122 = vrot.slane %v1121, 4
        %v1123 = vmax.f32 %v1121, %v1122
        %v1124 = vrot.slane %v1123, 2
        %v1125 = vmax.f32 %v1123, %v1124
        %v1126 = vrot.slane %v1125, 1
        %v1127 = vmax.f32 %v1125, %v1126
        %v1128 = vsub.f32 %v1117, %v1127
        %v1129 = vmul.f32 %v1128, 1.442695
        %v1130 = vpow.pop %v1129
        %v1131 = vsel %vm1120, %v1130, 0.0
        %v1132 = vrot.slane %v1131, 4
        %v1133 = vadd.f32 %v1131, %v1132
        %v1134 = vrot.slane %v1133, 2
        %v1135 = vadd.f32 %v1133, %v1134
        %v1136 = vrot.slane %v1135, 1
        %v1137 = vadd.f32 %v1135, %v1136
        %v1138 = vrcp.pop %v1137
        %v1139 = vmul.f32 %v1130, %v1138
        %v1140 = vld [vmem:[%s3] sm:$0xff]
        %v1142 = vsel %vm1120, %v1139, 0
        %1144 = vmatprep.subr.mxu0 0.0
        %1145 = vmatpush1.msra.mxu0 %v1140
        %1146 = vmatprep.subr.mxu0 0.0
        %1147 = vmatpush1.msra.mxu0 0.0
        %1148 = vmatprep.subr.mxu0 0.0
        %1149 = vmatpush1.msra.mxu0 0.0
        %1150 = vmatprep.subr.mxu0 0.0
        %1151 = vmatpush1.msra.mxu0 0.0
        %1152 = vmatprep.subr.mxu0 0.0
        %1153 = vmatpush1.msra.mxu0 0.0
        %1154 = vmatprep.subr.mxu0 0.0
        %1155 = vmatpush1.msra.mxu0 0.0
        %1156 = vmatprep.subr.mxu0 0.0
        %1157 = vmatpush1.msra.mxu0 0.0
        %1158 = vmatprep.subr.mxu0 0.0
        %1159 = vmatpush1.msra.mxu0 0.0
        %1160 = vmatprep.subr.mxu0 0.0
        %1161 = vmatpush1.msra.mxu0 0.0
        %1162 = vmatprep.subr.mxu0 0.0
        %1163 = vmatpush1.msra.mxu0 0.0
        %1164 = vmatprep.subr.mxu0 0.0
        %1165 = vmatpush1.msra.mxu0 0.0
        %1166 = vmatprep.subr.mxu0 0.0
        %1167 = vmatpush1.msra.mxu0 0.0
        %1168 = vmatprep.subr.mxu0 0.0
        %1169 = vmatpush1.msra.mxu0 0.0
        %1170 = vmatprep.subr.mxu0 0.0
        %1171 = vmatpush1.msra.mxu0 0.0
        %1172 = vmatprep.subr.mxu0 0.0
        %1173 = vmatpush1.msra.mxu0 0.0
        %1174 = vmatprep.subr.mxu0 0.0
        %1175 = vmatpush1.msra.mxu0 0.0
        %1176 = vmatprep.subr.mxu0 0.0
        %1177 = vmatpush1.msra.mxu0 0.0
        %1178 = vmatprep.subr.mxu0 0.0
        %1179 = vmatpush1.msra.mxu0 0.0
        %1180 = vmatprep.subr.mxu0 0.0
        %1181 = vmatpush1.msra.mxu0 0.0
        %1182 = vmatprep.subr.mxu0 0.0
        %1183 = vmatpush1.msra.mxu0 0.0
        %1184 = vmatprep.subr.mxu0 0.0
        %1185 = vmatpush1.msra.mxu0 0.0
        %1186 = vmatprep.subr.mxu0 0.0
        %1187 = vmatpush1.msra.mxu0 0.0
        %1188 = vmatprep.subr.mxu0 0.0
        %1189 = vmatpush1.msra.mxu0 0.0
        %1190 = vmatprep.subr.mxu0 0.0
        %1191 = vmatpush1.msra.mxu0 0.0
        %1192 = vmatprep.subr.mxu0 0.0
        %1193 = vmatpush1.msra.mxu0 0.0
        %1194 = vmatprep.subr.mxu0 0.0
        %1195 = vmatpush1.msra.mxu0 0.0
        %1196 = vmatprep.subr.mxu0 0.0
        %1197 = vmatpush1.msra.mxu0 0.0
        %1198 = vmatprep.subr.mxu0 0.0
        %1199 = vmatpush1.msra.mxu0 0.0
        %1200 = vmatprep.subr.mxu0 0.0
        %1201 = vmatpush1.msra.mxu0 0.0
        %1202 = vmatprep.subr.mxu0 0.0
        %1203 = vmatpush1.msra.mxu0 0.0
        %1204 = vmatprep.subr.mxu0 0.0
        %1205 = vmatpush1.msra.mxu0 0.0
        %1206 = vmatprep.subr.mxu0 0.0
        %1207 = vmatpush1.msra.mxu0 0.0
        %1208 = vmatprep.mubr.f32.mxu0 0.0
        %1209 = vmatmul.mubr.f32.gmra.mrb[0].mxu0 %v1142
        %v1210 = vpop.f32.mrb[0].mxu0
        %v1211 = vadd.f32 0.0, %v1210
        %v1212 = vpop.f32.mrb[0].mxu0
        %1213 = vdwg.mxu0
        %v1214 = vld [vmem:[#allocation5] sm:$0xff]
        %v1215 = vld [vmem:[#allocation5 + $0x8] sm:$0xff]
        %v1216 = vld [vmem:[#allocation5 + $0x10] sm:$0xff]
        %v1217 = vld [vmem:[#allocation5 + $0x18] sm:$0xff]
        %v1219 = vsel %vm1120, %v1214, 0
        %v1222 = vsel %vm1120, %v1215, 0
        %v1225 = vsel %vm1120, %v1216, 0
        %v1228 = vsel %vm1120, %v1217, 0
        %1230 = vmatprep.subr.mxu0 0.0
        %1231 = vmatpush1.msra.mxu0 %v1211
        %1232 = vmatprep.subr.mxu0 0.0
        %1233 = vmatpush1.msra.mxu0 0.0
        %1234 = vmatprep.subr.mxu0 0.0
        %1235 = vmatpush1.msra.mxu0 0.0
        %1236 = vmatprep.subr.mxu0 0.0
        %1237 = vmatpush1.msra.mxu0 0.0
        %1238 = vmatprep.subr.mxu0 0.0
        %1239 = vmatpush1.msra.mxu0 0.0
        %1240 = vmatprep.subr.mxu0 0.0
        %1241 = vmatpush1.msra.mxu0 0.0
        %1242 = vmatprep.subr.mxu0 0.0
        %1243 = vmatpush1.msra.mxu0 0.0
        %1244 = vmatprep.subr.mxu0 0.0
        %1245 = vmatpush1.msra.mxu0 0.0
        %1246 = vmatprep.subr.mxu0 0.0
        %1247 = vmatpush1.msra.mxu0 0.0
        %1248 = vmatprep.subr.mxu0 0.0
        %1249 = vmatpush1.msra.mxu0 0.0
        %1250 = vmatprep.subr.mxu0 0.0
        %1251 = vmatpush1.msra.mxu0 0.0
        %1252 = vmatprep.subr.mxu0 0.0
        %1253 = vmatpush1.msra.mxu0 0.0
        %1254 = vmatprep.subr.mxu0 0.0
        %1255 = vmatpush1.msra.mxu0 0.0
        %1256 = vmatprep.subr.mxu0 0.0
        %1257 = vmatpush1.msra.mxu0 0.0
        %1258 = vmatprep.subr.mxu0 0.0
        %1259 = vmatpush1.msra.mxu0 0.0
        %1260 = vmatprep.subr.mxu0 0.0
        %1261 = vmatpush1.msra.mxu0 0.0
        %1262 = vmatprep.subr.mxu0 0.0
        %1263 = vmatpush1.msra.mxu0 0.0
        %1264 = vmatprep.subr.mxu0 0.0
        %1265 = vmatpush1.msra.mxu0 0.0
        %1266 = vmatprep.subr.mxu0 0.0
        %1267 = vmatpush1.msra.mxu0 0.0
        %1268 = vmatprep.subr.mxu0 0.0
        %1269 = vmatpush1.msra.mxu0 0.0
        %1270 = vmatprep.subr.mxu0 0.0
        %1271 = vmatpush1.msra.mxu0 0.0
        %1272 = vmatprep.subr.mxu0 0.0
        %1273 = vmatpush1.msra.mxu0 0.0
        %1274 = vmatprep.subr.mxu0 0.0
        %1275 = vmatpush1.msra.mxu0 0.0
        %1276 = vmatprep.subr.mxu0 0.0
        %1277 = vmatpush1.msra.mxu0 0.0
        %1278 = vmatprep.subr.mxu0 0.0
        %1279 = vmatpush1.msra.mxu0 0.0
        %1280 = vmatprep.subr.mxu0 0.0
        %1281 = vmatpush1.msra.mxu0 0.0
        %1282 = vmatprep.subr.mxu0 0.0
        %1283 = vmatpush1.msra.mxu0 0.0
        %1284 = vmatprep.subr.mxu0 0.0
        %1285 = vmatpush1.msra.mxu0 0.0
        %1286 = vmatprep.subr.mxu0 0.0
        %1287 = vmatpush1.msra.mxu0 0.0
        %1288 = vmatprep.subr.mxu0 0.0
        %1289 = vmatpush1.msra.mxu0 0.0
        %1290 = vmatprep.subr.mxu0 0.0
        %1291 = vmatpush1.msra.mxu0 0.0
        %1292 = vmatprep.subr.mxu0 0.0
        %1293 = vmatpush1.msra.mxu0 0.0
        %1294 = vmatprep.mubr.f32.mxu0 0.0
        %1295 = vmatmul.mubr.f32.gmra.mrb[0].mxu0 %v1219
        %v1296 = vpop.f32.mrb[0].mxu0
        %v1297 = vadd.f32 0.0, %v1296
        %v1298 = vpop.f32.mrb[0].mxu0
        %1299 = vmatprep.mubr.f32.mxu0 0.0
        %1300 = vmatmul.mubr.f32.gmra.mrb[0].mxu0 %v1222
        %v1301 = vpop.f32.mrb[0].mxu0
        %v1302 = vadd.f32 0.0, %v1301
        %v1303 = vpop.f32.mrb[0].mxu0
        %1304 = vmatprep.mubr.f32.mxu0 0.0
        %1305 = vmatmul.mubr.f32.gmra.mrb[0].mxu0 %v1225
        %v1306 = vpop.f32.mrb[0].mxu0
        %v1307 = vadd.f32 0.0, %v1306
        %v1308 = vpop.f32.mrb[0].mxu0
        %1309 = vmatprep.mubr.f32.mxu0 0.0
        %1310 = vmatmul.mubr.f32.gmra.mrb[0].mxu0 %v1228
        %v1311 = vpop.f32.mrb[0].mxu0
        %v1312 = vadd.f32 0.0, %v1311
        %v1313 = vpop.f32.mrb[0].mxu0
        %1314 = vdwg.mxu0
        %1316 = vset.pattern.permute.xlu0 0
        %1317 = vperm.xlu0 %1316, %v1297
        %v1318 = vpop.permute.xlu0 %1317
        %1321 = vset.pattern.permute.xlu0 0
        %1322 = vperm.xlu0 %1321, %v1302
        %v1323 = vpop.permute.xlu0 %1322
        %1326 = vset.pattern.permute.xlu0 0
        %1327 = vperm.xlu0 %1326, %v1307
        %v1328 = vpop.permute.xlu0 %1327
        %1331 = vset.pattern.permute.xlu0 0
        %1332 = vperm.xlu0 %1331, %v1312
        %v1333 = vpop.permute.xlu0 %1332
        %v1335 = vmul.f32 %v891, %v1318
        %v1336 = vmul.f32 %v892, %v1323
        %v1337 = vmul.f32 %v893, %v1328
        %v1338 = vmul.f32 %v894, %v1333
        %1339 = vmatprep.subr.mxu0 0.0
        %1340 = vmatpush1.msra.mxu0 %v1335
        %1341 = vmatprep.subr.mxu0 0.0
        %1342 = vmatpush1.msra.mxu0 %v1336
        %1343 = vmatprep.subr.mxu0 0.0
        %1344 = vmatpush1.msra.mxu0 %v1337
        %1345 = vmatprep.subr.mxu0 0.0
        %1346 = vmatpush1.msra.mxu0 %v1338
        %1347 = vmatprep.subr.mxu0 0.0
        %1348 = vmatpush1.msra.mxu0 0.0
        %1349 = vmatprep.subr.mxu0 0.0
        %1350 = vmatpush1.msra.mxu0 0.0
        %1351 = vmatprep.subr.mxu0 0.0
        %1352 = vmatpush1.msra.mxu0 0.0
        %1353 = vmatprep.subr.mxu0 0.0
        %1354 = vmatpush1.msra.mxu0 0.0
        %1355 = vmatprep.subr.mxu0 0.0
        %1356 = vmatpush1.msra.mxu0 0.0
        %1357 = vmatprep.subr.mxu0 0.0
        %1358 = vmatpush1.msra.mxu0 0.0
        %1359 = vmatprep.subr.mxu0 0.0
        %1360 = vmatpush1.msra.mxu0 0.0
        %1361 = vmatprep.subr.mxu0 0.0
        %1362 = vmatpush1.msra.mxu0 0.0
        %1363 = vmatprep.subr.mxu0 0.0
        %1364 = vmatpush1.msra.mxu0 0.0
        %1365 = vmatprep.subr.mxu0 0.0
        %1366 = vmatpush1.msra.mxu0 0.0
        %1367 = vmatprep.subr.mxu0 0.0
        %1368 = vmatpush1.msra.mxu0 0.0
        %1369 = vmatprep.subr.mxu0 0.0
        %1370 = vmatpush1.msra.mxu0 0.0
        %1371 = vmatprep.subr.mxu0 0.0
        %1372 = vmatpush1.msra.mxu0 0.0
        %1373 = vmatprep.subr.mxu0 0.0
        %1374 = vmatpush1.msra.mxu0 0.0
        %1375 = vmatprep.subr.mxu0 0.0
        %1376 = vmatpush1.msra.mxu0 0.0
        %1377 = vmatprep.subr.mxu0 0.0
        %1378 = vmatpush1.msra.mxu0 0.0
        %1379 = vmatprep.subr.mxu0 0.0
        %1380 = vmatpush1.msra.mxu0 0.0
        %1381 = vmatprep.subr.mxu0 0.0
        %1382 = vmatpush1.msra.mxu0 0.0
        %1383 = vmatprep.subr.mxu0 0.0
        %1384 = vmatpush1.msra.mxu0 0.0
        %1385 = vmatprep.subr.mxu0 0.0
        %1386 = vmatpush1.msra.mxu0 0.0
        %1387 = vmatprep.subr.mxu0 0.0
        %1388 = vmatpush1.msra.mxu0 0.0
        %1389 = vmatprep.subr.mxu0 0.0
        %1390 = vmatpush1.msra.mxu0 0.0
        %1391 = vmatprep.subr.mxu0 0.0
        %1392 = vmatpush1.msra.mxu0 0.0
        %1393 = vmatprep.subr.mxu0 0.0
        %1394 = vmatpush1.msra.mxu0 0.0
        %1395 = vmatprep.subr.mxu0 0.0
        %1396 = vmatpush1.msra.mxu0 0.0
        %1397 = vmatprep.subr.mxu0 0.0
        %1398 = vmatpush1.msra.mxu0 0.0
        %1399 = vmatprep.subr.mxu0 0.0
        %1400 = vmatpush1.msra.mxu0 0.0
        %1401 = vmatprep.subr.mxu0 0.0
        %1402 = vmatpush1.msra.mxu0 0.0
        %1403 = vmatprep.mubr.f32.mxu0 0.0
        %1404 = vmatmul.mubr.f32.gmra.mrb[0].mxu0 %v576
        %v1405 = vpop.f32.mrb[0].mxu0
        %v1406 = vadd.f32 0.0, %v1405
        %v1407 = vpop.f32.mrb[0].mxu0
        %1408 = vmatprep.mubr.f32.mxu0 0.0
        %1409 = vmatmul.mubr.f32.gmra.mrb[0].mxu0 %v579
        %v1410 = vpop.f32.mrb[0].mxu0
        %v1411 = vadd.f32 0.0, %v1410
        %v1412 = vpop.f32.mrb[0].mxu0
        %1413 = vdwg.mxu0
        %v1414 = vld [vmem:[%s7] sm:$0xf]
        %v1416 = vsel %vm1042, %v1406, 0
        %v1419 = vsel %vm1042, %v1411, 0
        %v1422 = vsel %vm1046, %v1414, 0
        %1424 = vmatprep.subr.mxu0 0.0
        %1425 = vmatpush1.msra.mxu0 %v1422
        %1426 = vmatprep.subr.mxu0 0.0
        %1427 = vmatpush1.msra.mxu0 0.0
        %1428 = vmatprep.subr.mxu0 0.0
        %1429 = vmatpush1.msra.mxu0 0.0
        %1430 = vmatprep.subr.mxu0 0.0
        %1431 = vmatpush1.msra.mxu0 0.0
        %1432 = vmatprep.subr.mxu0 0.0
        %1433 = vmatpush1.msra.mxu0 0.0
        %1434 = vmatprep.subr.mxu0 0.0
        %1435 = vmatpush1.msra.mxu0 0.0
        %1436 = vmatprep.subr.mxu0 0.0
        %1437 = vmatpush1.msra.mxu0 0.0
        %1438 = vmatprep.subr.mxu0 0.0
        %1439 = vmatpush1.msra.mxu0 0.0
        %1440 = vmatprep.subr.mxu0 0.0
        %1441 = vmatpush1.msra.mxu0 0.0
        %1442 = vmatprep.subr.mxu0 0.0
        %1443 = vmatpush1.msra.mxu0 0.0
        %1444 = vmatprep.subr.mxu0 0.0
        %1445 = vmatpush1.msra.mxu0 0.0
        %1446 = vmatprep.subr.mxu0 0.0
        %1447 = vmatpush1.msra.mxu0 0.0
        %1448 = vmatprep.subr.mxu0 0.0
        %1449 = vmatpush1.msra.mxu0 0.0
        %1450 = vmatprep.subr.mxu0 0.0
        %1451 = vmatpush1.msra.mxu0 0.0
        %1452 = vmatprep.subr.mxu0 0.0
        %1453 = vmatpush1.msra.mxu0 0.0
        %1454 = vmatprep.subr.mxu0 0.0
        %1455 = vmatpush1.msra.mxu0 0.0
        %1456 = vmatprep.subr.mxu0 0.0
        %1457 = vmatpush1.msra.mxu0 0.0
        %1458 = vmatprep.subr.mxu0 0.0
        %1459 = vmatpush1.msra.mxu0 0.0
        %1460 = vmatprep.subr.mxu0 0.0
        %1461 = vmatpush1.msra.mxu0 0.0
        %1462 = vmatprep.subr.mxu0 0.0
        %1463 = vmatpush1.msra.mxu0 0.0
        %1464 = vmatprep.subr.mxu0 0.0
        %1465 = vmatpush1.msra.mxu0 0.0
        %1466 = vmatprep.subr.mxu0 0.0
        %1467 = vmatpush1.msra.mxu0 0.0
        %1468 = vmatprep.subr.mxu0 0.0
        %1469 = vmatpush1.msra.mxu0 0.0
        %1470 = vmatprep.subr.mxu0 0.0
        %1471 = vmatpush1.msra.mxu0 0.0
        %1472 = vmatprep.subr.mxu0 0.0
        %1473 = vmatpush1.msra.mxu0 0.0
        %1474 = vmatprep.subr.mxu0 0.0
        %1475 = vmatpush1.msra.mxu0 0.0
        %1476 = vmatprep.subr.mxu0 0.0
        %1477 = vmatpush1.msra.mxu0 0.0
        %1478 = vmatprep.subr.mxu0 0.0
        %1479 = vmatpush1.msra.mxu0 0.0
        %1480 = vmatprep.subr.mxu0 0.0
        %1481 = vmatpush1.msra.mxu0 0.0
        %1482 = vmatprep.subr.mxu0 0.0
        %1483 = vmatpush1.msra.mxu0 0.0
        %1484 = vmatprep.subr.mxu0 0.0
        %1485 = vmatpush1.msra.mxu0 0.0
        %1486 = vmatprep.subr.mxu0 0.0
        %1487 = vmatpush1.msra.mxu0 0.0
        %1488 = vmatprep.mubr.f32.mxu0 0.0
        %1489 = vmatmul.mubr.f32.gmra.mrb[0].mxu0 %v1416
        %v1490 = vpop.f32.mrb[0].mxu0
        %v1491 = vadd.f32 0.0, %v1490
        %v1492 = vpop.f32.mrb[0].mxu0
        %1493 = vmatprep.mubr.f32.mxu0 0.0
        %1494 = vmatmul.mubr.f32.gmra.mrb[0].mxu0 %v1419
        %v1495 = vpop.f32.mrb[0].mxu0
        %v1496 = vadd.f32 0.0, %v1495
        %v1497 = vpop.f32.mrb[0].mxu0
        %1498 = vdwg.mxu0
        %1501 = vrot.lane.b32.xlu0 %v802, 120
        %v1502 = vpop.permute.xlu0 %1501
        %1503 = vrot.lane.b32.xlu0 %v807, 120
        %v1504 = vpop.permute.xlu0 %1503
        %v1505 = vsel %vm1120, %v1502, 0
        %v1507 = vsel %vm1120, %v1504, 0
        %1509 = vmatprep.subr.mxu0 0.0
        %1510 = vmatpush1.msra.mxu0 %v1139
        %1511 = vmatprep.subr.mxu0 0.0
        %1512 = vmatpush1.msra.mxu0 0.0
        %1513 = vmatprep.subr.mxu0 0.0
        %1514 = vmatpush1.msra.mxu0 0.0
        %1515 = vmatprep.subr.mxu0 0.0
        %1516 = vmatpush1.msra.mxu0 0.0
        %1517 = vmatprep.subr.mxu0 0.0
        %1518 = vmatpush1.msra.mxu0 0.0
        %1519 = vmatprep.subr.mxu0 0.0
        %1520 = vmatpush1.msra.mxu0 0.0
        %1521 = vmatprep.subr.mxu0 0.0
        %1522 = vmatpush1.msra.mxu0 0.0
        %1523 = vmatprep.subr.mxu0 0.0
        %1524 = vmatpush1.msra.mxu0 0.0
        %1525 = vmatprep.subr.mxu0 0.0
        %1526 = vmatpush1.msra.mxu0 0.0
        %1527 = vmatprep.subr.mxu0 0.0
        %1528 = vmatpush1.msra.mxu0 0.0
        %1529 = vmatprep.subr.mxu0 0.0
        %1530 = vmatpush1.msra.mxu0 0.0
        %1531 = vmatprep.subr.mxu0 0.0
        %1532 = vmatpush1.msra.mxu0 0.0
        %1533 = vmatprep.subr.mxu0 0.0
        %1534 = vmatpush1.msra.mxu0 0.0
        %1535 = vmatprep.subr.mxu0 0.0
        %1536 = vmatpush1.msra.mxu0 0.0
        %1537 = vmatprep.subr.mxu0 0.0
        %1538 = vmatpush1.msra.mxu0 0.0
        %1539 = vmatprep.subr.mxu0 0.0
        %1540 = vmatpush1.msra.mxu0 0.0
        %1541 = vmatprep.subr.mxu0 0.0
        %1542 = vmatpush1.msra.mxu0 0.0
        %1543 = vmatprep.subr.mxu0 0.0
        %1544 = vmatpush1.msra.mxu0 0.0
        %1545 = vmatprep.subr.mxu0 0.0
        %1546 = vmatpush1.msra.mxu0 0.0
        %1547 = vmatprep.subr.mxu0 0.0
        %1548 = vmatpush1.msra.mxu0 0.0
        %1549 = vmatprep.subr.mxu0 0.0
        %1550 = vmatpush1.msra.mxu0 0.0
        %1551 = vmatprep.subr.mxu0 0.0
        %1552 = vmatpush1.msra.mxu0 0.0
        %1553 = vmatprep.subr.mxu0 0.0
        %1554 = vmatpush1.msra.mxu0 0.0
        %1555 = vmatprep.subr.mxu0 0.0
        %1556 = vmatpush1.msra.mxu0 0.0
        %1557 = vmatprep.subr.mxu0 0.0
        %1558 = vmatpush1.msra.mxu0 0.0
        %1559 = vmatprep.subr.mxu0 0.0
        %1560 = vmatpush1.msra.mxu0 0.0
        %1561 = vmatprep.subr.mxu0 0.0
        %1562 = vmatpush1.msra.mxu0 0.0
        %1563 = vmatprep.subr.mxu0 0.0
        %1564 = vmatpush1.msra.mxu0 0.0
        %1565 = vmatprep.subr.mxu0 0.0
        %1566 = vmatpush1.msra.mxu0 0.0
        %1567 = vmatprep.subr.mxu0 0.0
        %1568 = vmatpush1.msra.mxu0 0.0
        %1569 = vmatprep.subr.mxu0 0.0
        %1570 = vmatpush1.msra.mxu0 0.0
        %1571 = vmatprep.subr.mxu0 0.0
        %1572 = vmatpush1.msra.mxu0 0.0
        %1573 = vmatprep.mubr.f32.mxu0 0.0
        %1574 = vmatmul.mubr.f32.gmra.mrb[0].mxu0 %v1505
        %v1575 = vpop.f32.mrb[0].mxu0
        %v1576 = vadd.f32 0.0, %v1575
        %v1577 = vpop.f32.mrb[0].mxu0
        %1578 = vmatprep.mubr.f32.mxu0 0.0
        %1579 = vmatmul.mubr.f32.gmra.mrb[0].mxu0 %v1507
        %v1580 = vpop.f32.mrb[0].mxu0
        %v1581 = vadd.f32 0.0, %v1580
        %v1582 = vpop.f32.mrb[0].mxu0
        %1583 = vdwg.mxu0
        %v1585 = vsel %vm1120, %v1576, 0
        %v1588 = vsel %vm1120, %v1581, 0
        %v1591 = vsel %vm1120, %v1491, 0
        %v1594 = vsel %vm1120, %v1496, 0
        %1596 = vmatprep.subr.mxu0 0.0
        %1597 = vmatpush1.xpose.msra.mxu0 %v1591
        %1598 = vmatprep.subr.mxu0 0.0
        %1599 = vmatpush1.xpose.msra.mxu0 %v1594
        %1600 = vmatprep.subr.mxu0 0.0
        %1601 = vmatpush1.xpose.msra.mxu0 0.0
        %1602 = vmatprep.subr.mxu0 0.0
        %1603 = vmatpush1.xpose.msra.mxu0 0.0
        %1604 = vmatprep.subr.mxu0 0.0
        %1605 = vmatpush1.xpose.msra.mxu0 0.0
        %1606 = vmatprep.subr.mxu0 0.0
        %1607 = vmatpush1.xpose.msra.mxu0 0.0
        %1608 = vmatprep.subr.mxu0 0.0
        %1609 = vmatpush1.xpose.msra.mxu0 0.0
        %1610 = vmatprep.subr.mxu0 0.0
        %1611 = vmatpush1.xpose.msra.mxu0 0.0
        %1612 = vmatprep.subr.mxu0 0.0
        %1613 = vmatpush1.xpose.msra.mxu0 0.0
        %1614 = vmatprep.subr.mxu0 0.0
        %1615 = vmatpush1.xpose.msra.mxu0 0.0
        %1616 = vmatprep.subr.mxu0 0.0
        %1617 = vmatpush1.xpose.msra.mxu0 0.0
        %1618 = vmatprep.subr.mxu0 0.0
        %1619 = vmatpush1.xpose.msra.mxu0 0.0
        %1620 = vmatprep.subr.mxu0 0.0
        %1621 = vmatpush1.xpose.msra.mxu0 0.0
        %1622 = vmatprep.subr.mxu0 0.0
        %1623 = vmatpush1.xpose.msra.mxu0 0.0
        %1624 = vmatprep.subr.mxu0 0.0
        %1625 = vmatpush1.xpose.msra.mxu0 0.0
        %1626 = vmatprep.subr.mxu0 0.0
        %1627 = vmatpush1.xpose.msra.mxu0 0.0
        %1628 = vmatprep.subr.mxu0 0.0
        %1629 = vmatpush1.xpose.msra.mxu0 0.0
        %1630 = vmatprep.subr.mxu0 0.0
        %1631 = vmatpush1.xpose.msra.mxu0 0.0
        %1632 = vmatprep.subr.mxu0 0.0
        %1633 = vmatpush1.xpose.msra.mxu0 0.0
        %1634 = vmatprep.subr.mxu0 0.0
        %1635 = vmatpush1.xpose.msra.mxu0 0.0
        %1636 = vmatprep.subr.mxu0 0.0
        %1637 = vmatpush1.xpose.msra.mxu0 0.0
        %1638 = vmatprep.subr.mxu0 0.0
        %1639 = vmatpush1.xpose.msra.mxu0 0.0
        %1640 = vmatprep.subr.mxu0 0.0
        %1641 = vmatpush1.xpose.msra.mxu0 0.0
        %1642 = vmatprep.subr.mxu0 0.0
        %1643 = vmatpush1.xpose.msra.mxu0 0.0
        %1644 = vmatprep.subr.mxu0 0.0
        %1645 = vmatpush1.xpose.msra.mxu0 0.0
        %1646 = vmatprep.subr.mxu0 0.0
        %1647 = vmatpush1.xpose.msra.mxu0 0.0
        %1648 = vmatprep.subr.mxu0 0.0
        %1649 = vmatpush1.xpose.msra.mxu0 0.0
        %1650 = vmatprep.subr.mxu0 0.0
        %1651 = vmatpush1.xpose.msra.mxu0 0.0
        %1652 = vmatprep.subr.mxu0 0.0
        %1653 = vmatpush1.xpose.msra.mxu0 0.0
        %1654 = vmatprep.subr.mxu0 0.0
        %1655 = vmatpush1.xpose.msra.mxu0 0.0
        %1656 = vmatprep.subr.mxu0 0.0
        %1657 = vmatpush1.xpose.msra.mxu0 0.0
        %1658 = vmatprep.subr.mxu0 0.0
        %1659 = vmatpush1.xpose.msra.mxu0 0.0
        %1660 = vmatprep.mubr.f32.mxu0 0.0
        %1661 = vmatmul.mubr.f32.gmra.mrb[0].mxu0 %v1585
        %v1662 = vpop.f32.mrb[0].mxu0
        %v1663 = vadd.f32 0.0, %v1662
        %v1664 = vpop.f32.mrb[0].mxu0
        %1665 = vmatprep.mubr.f32.mxu0 0.0
        %1666 = vmatmul.mubr.f32.gmra.mrb[0].mxu0 %v1588
        %v1667 = vpop.f32.mrb[0].mxu0
        %v1668 = vadd.f32 0.0, %v1667
        %v1669 = vpop.f32.mrb[0].mxu0
        %1670 = vdwg.mxu0
        %v1671 = vsel %vm811, %v1663, -inf
        %1672 = vmax.xlane.f32.xlu0 %v1671
        %v1673 = vpop.xlane.xlu0 %1672
        %v1674 = vsel %vm811, %v1668, -inf
        %1675 = vmax.xlane.f32.xlu0 %v1674
        %v1676 = vpop.xlane.xlu0 %1675
        %v1677 = vsub.f32 %v1663, %v1673
        %v1678 = vsub.f32 %v1668, %v1676
        %v1679 = vmul.f32 %v1677, 1.442695
        %v1680 = vpow.pop %v1679
        %v1681 = vmul.f32 %v1678, 1.442695
        %v1682 = vpow.pop %v1681
        %v1683 = vsel %vm811, %v1680, 0.0
        %1684 = vadd.xlane.f32.xlu0 %v1683
        %v1685 = vpop.xlane.xlu0 %1684
        %v1686 = vsel %vm811, %v1682, 0.0
        %1687 = vadd.xlane.f32.xlu0 %v1686
        %v1688 = vpop.xlane.xlu0 %1687
        %v1689 = vrcp.pop %v1685
        %v1690 = vrcp.pop %v1688
        %v1691 = vmul.f32 %v1680, %v1689
        %v1692 = vmul.f32 %v1682, %v1690
        %v1693 = vld [vmem:[%s8] sm:$0xff]
        %v1694 = vld [vmem:[%s8 + $0x8] sm:$0xff]
        %v1695 = vmul.f32 %v1693, %v1691
        %v1696 = vmul.f32 %v1694, %v1692
        %s1697 = scalar_lea.vmem %s8, 16
        %v1698 = vld [vmem:[%s1697] sm:$0xff]
        %v1699 = vld [vmem:[%s1697 + $0x8] sm:$0xff]
        %v1700 = vmul.f32 %v1698, %v1691
        %v1701 = vmul.f32 %v1699, %v1692
        %v1703 = vsel %vm811, %v1700, 0
        %v1706 = vsel %vm811, %v1701, 0
        %1708 = vmatprep.subr.mxu0 0.0
        %1709 = vmatpush1.msra.mxu0 %v725
        %1710 = vmatprep.subr.mxu0 0.0
        %1711 = vmatpush1.msra.mxu0 %v731
        %1712 = vmatprep.subr.mxu0 0.0
        %1713 = vmatpush1.msra.mxu0 0.0
        %1714 = vmatprep.subr.mxu0 0.0
        %1715 = vmatpush1.msra.mxu0 0.0
        %1716 = vmatprep.subr.mxu0 0.0
        %1717 = vmatpush1.msra.mxu0 0.0
        %1718 = vmatprep.subr.mxu0 0.0
        %1719 = vmatpush1.msra.mxu0 0.0
        %1720 = vmatprep.subr.mxu0 0.0
        %1721 = vmatpush1.msra.mxu0 0.0
        %1722 = vmatprep.subr.mxu0 0.0
        %1723 = vmatpush1.msra.mxu0 0.0
        %1724 = vmatprep.subr.mxu0 0.0
        %1725 = vmatpush1.msra.mxu0 0.0
        %1726 = vmatprep.subr.mxu0 0.0
        %1727 = vmatpush1.msra.mxu0 0.0
        %1728 = vmatprep.subr.mxu0 0.0
        %1729 = vmatpush1.msra.mxu0 0.0
        %1730 = vmatprep.subr.mxu0 0.0
        %1731 = vmatpush1.msra.mxu0 0.0
        %1732 = vmatprep.subr.mxu0 0.0
        %1733 = vmatpush1.msra.mxu0 0.0
        %1734 = vmatprep.subr.mxu0 0.0
        %1735 = vmatpush1.msra.mxu0 0.0
        %1736 = vmatprep.subr.mxu0 0.0
        %1737 = vmatpush1.msra.mxu0 0.0
        %1738 = vmatprep.subr.mxu0 0.0
        %1739 = vmatpush1.msra.mxu0 0.0
        %1740 = vmatprep.subr.mxu0 0.0
        %1741 = vmatpush1.msra.mxu0 0.0
        %1742 = vmatprep.subr.mxu0 0.0
        %1743 = vmatpush1.msra.mxu0 0.0
        %1744 = vmatprep.subr.mxu0 0.0
        %1745 = vmatpush1.msra.mxu0 0.0
        %1746 = vmatprep.subr.mxu0 0.0
        %1747 = vmatpush1.msra.mxu0 0.0
        %1748 = vmatprep.subr.mxu0 0.0
        %1749 = vmatpush1.msra.mxu0 0.0
        %1750 = vmatprep.subr.mxu0 0.0
        %1751 = vmatpush1.msra.mxu0 0.0
        %1752 = vmatprep.subr.mxu0 0.0
        %1753 = vmatpush1.msra.mxu0 0.0
        %1754 = vmatprep.subr.mxu0 0.0
        %1755 = vmatpush1.msra.mxu0 0.0
        %1756 = vmatprep.subr.mxu0 0.0
        %1757 = vmatpush1.msra.mxu0 0.0
        %1758 = vmatprep.subr.mxu0 0.0
        %1759 = vmatpush1.msra.mxu0 0.0
        %1760 = vmatprep.subr.mxu0 0.0
        %1761 = vmatpush1.msra.mxu0 0.0
        %1762 = vmatprep.subr.mxu0 0.0
        %1763 = vmatpush1.msra.mxu0 0.0
        %1764 = vmatprep.subr.mxu0 0.0
        %1765 = vmatpush1.msra.mxu0 0.0
        %1766 = vmatprep.subr.mxu0 0.0
        %1767 = vmatpush1.msra.mxu0 0.0
        %1768 = vmatprep.subr.mxu0 0.0
        %1769 = vmatpush1.msra.mxu0 0.0
        %1770 = vmatprep.subr.mxu0 0.0
        %1771 = vmatpush1.msra.mxu0 0.0
        %1772 = vmatprep.mubr.f32.mxu0 0.0
        %1773 = vmatmul.mubr.f32.gmra.mrb[0].mxu0 %v1703
        %v1774 = vpop.f32.mrb[0].mxu0
        %v1775 = vadd.f32 0.0, %v1774
        %v1776 = vpop.f32.mrb[0].mxu0
        %1777 = vmatprep.mubr.f32.mxu0 0.0
        %1778 = vmatmul.mubr.f32.gmra.mrb[0].mxu0 %v1706
        %v1779 = vpop.f32.mrb[0].mxu0
        %v1780 = vadd.f32 0.0, %v1779
        %v1781 = vpop.f32.mrb[0].mxu0
        %1782 = vdwg.mxu0
        %v1784 = vsel %vm811, %v1695, 0
        %v1787 = vsel %vm811, %v1696, 0
        %1789 = vmatprep.subr.mxu0 0.0
        %1790 = vmatpush1.msra.mxu0 %v650
        %1791 = vmatprep.subr.mxu0 0.0
        %1792 = vmatpush1.msra.mxu0 %v656
        %1793 = vmatprep.subr.mxu0 0.0
        %1794 = vmatpush1.msra.mxu0 0.0
        %1795 = vmatprep.subr.mxu0 0.0
        %1796 = vmatpush1.msra.mxu0 0.0
        %1797 = vmatprep.subr.mxu0 0.0
        %1798 = vmatpush1.msra.mxu0 0.0
        %1799 = vmatprep.subr.mxu0 0.0
        %1800 = vmatpush1.msra.mxu0 0.0
        %1801 = vmatprep.subr.mxu0 0.0
        %1802 = vmatpush1.msra.mxu0 0.0
        %1803 = vmatprep.subr.mxu0 0.0
        %1804 = vmatpush1.msra.mxu0 0.0
        %1805 = vmatprep.subr.mxu0 0.0
        %1806 = vmatpush1.msra.mxu0 0.0
        %1807 = vmatprep.subr.mxu0 0.0
        %1808 = vmatpush1.msra.mxu0 0.0
        %1809 = vmatprep.subr.mxu0 0.0
        %1810 = vmatpush1.msra.mxu0 0.0
        %1811 = vmatprep.subr.mxu0 0.0
        %1812 = vmatpush1.msra.mxu0 0.0
        %1813 = vmatprep.subr.mxu0 0.0
        %1814 = vmatpush1.msra.mxu0 0.0
        %1815 = vmatprep.subr.mxu0 0.0
        %1816 = vmatpush1.msra.mxu0 0.0
        %1817 = vmatprep.subr.mxu0 0.0
        %1818 = vmatpush1.msra.mxu0 0.0
        %1819 = vmatprep.subr.mxu0 0.0
        %1820 = vmatpush1.msra.mxu0 0.0
        %1821 = vmatprep.subr.mxu0 0.0
        %1822 = vmatpush1.msra.mxu0 0.0
        %1823 = vmatprep.subr.mxu0 0.0
        %1824 = vmatpush1.msra.mxu0 0.0
        %1825 = vmatprep.subr.mxu0 0.0
        %1826 = vmatpush1.msra.mxu0 0.0
        %1827 = vmatprep.subr.mxu0 0.0
        %1828 = vmatpush1.msra.mxu0 0.0
        %1829 = vmatprep.subr.mxu0 0.0
        %1830 = vmatpush1.msra.mxu0 0.0
        %1831 = vmatprep.subr.mxu0 0.0
        %1832 = vmatpush1.msra.mxu0 0.0
        %1833 = vmatprep.subr.mxu0 0.0
        %1834 = vmatpush1.msra.mxu0 0.0
        %1835 = vmatprep.subr.mxu0 0.0
        %1836 = vmatpush1.msra.mxu0 0.0
        %1837 = vmatprep.subr.mxu0 0.0
        %1838 = vmatpush1.msra.mxu0 0.0
        %1839 = vmatprep.subr.mxu0 0.0
        %1840 = vmatpush1.msra.mxu0 0.0
        %1841 = vmatprep.subr.mxu0 0.0
        %1842 = vmatpush1.msra.mxu0 0.0
        %1843 = vmatprep.subr.mxu0 0.0
        %1844 = vmatpush1.msra.mxu0 0.0
        %1845 = vmatprep.subr.mxu0 0.0
        %1846 = vmatpush1.msra.mxu0 0.0
        %1847 = vmatprep.subr.mxu0 0.0
        %1848 = vmatpush1.msra.mxu0 0.0
        %1849 = vmatprep.subr.mxu0 0.0
        %1850 = vmatpush1.msra.mxu0 0.0
        %1851 = vmatprep.subr.mxu0 0.0
        %1852 = vmatpush1.msra.mxu0 0.0
        %1853 = vmatprep.mubr.f32.mxu0 0.0
        %1854 = vmatmul.mubr.f32.gmra.mrb[0].mxu0 %v1784
        %v1855 = vpop.f32.mrb[0].mxu0
        %v1856 = vadd.f32 %v1775, %v1855
        %v1857 = vpop.f32.mrb[0].mxu0
        %1858 = vmatprep.mubr.f32.mxu0 0.0
        %1859 = vmatmul.mubr.f32.gmra.mrb[0].mxu0 %v1787
        %v1860 = vpop.f32.mrb[0].mxu0
        %v1861 = vadd.f32 %v1780, %v1860
        %v1862 = vpop.f32.mrb[0].mxu0
        %1863 = vdwg.mxu0
        %s1864 = scalar_lea.vmem %s8, 32
        %v1865 = vld [vmem:[%s1864] sm:$0xff]
        %v1866 = vld [vmem:[%s1864 + $0x8] sm:$0xff]
        %v1867 = vmul.f32 %v1865, %v1691
        %v1868 = vmul.f32 %v1866, %v1692
        %v1870 = vsel %vm811, %v1867, 0
        %v1873 = vsel %vm811, %v1868, 0
        %1875 = vmatprep.subr.mxu0 0.0
        %1876 = vmatpush1.msra.mxu0 %v727
        %1877 = vmatprep.subr.mxu0 0.0
        %1878 = vmatpush1.msra.mxu0 %v733
        %1879 = vmatprep.subr.mxu0 0.0
        %1880 = vmatpush1.msra.mxu0 0.0
        %1881 = vmatprep.subr.mxu0 0.0
        %1882 = vmatpush1.msra.mxu0 0.0
        %1883 = vmatprep.subr.mxu0 0.0
        %1884 = vmatpush1.msra.mxu0 0.0
        %1885 = vmatprep.subr.mxu0 0.0
        %1886 = vmatpush1.msra.mxu0 0.0
        %1887 = vmatprep.subr.mxu0 0.0
        %1888 = vmatpush1.msra.mxu0 0.0
        %1889 = vmatprep.subr.mxu0 0.0
        %1890 = vmatpush1.msra.mxu0 0.0
        %1891 = vmatprep.subr.mxu0 0.0
        %1892 = vmatpush1.msra.mxu0 0.0
        %1893 = vmatprep.subr.mxu0 0.0
        %1894 = vmatpush1.msra.mxu0 0.0
        %1895 = vmatprep.subr.mxu0 0.0
        %1896 = vmatpush1.msra.mxu0 0.0
        %1897 = vmatprep.subr.mxu0 0.0
        %1898 = vmatpush1.msra.mxu0 0.0
        %1899 = vmatprep.subr.mxu0 0.0
        %1900 = vmatpush1.msra.mxu0 0.0
        %1901 = vmatprep.subr.mxu0 0.0
        %1902 = vmatpush1.msra.mxu0 0.0
        %1903 = vmatprep.subr.mxu0 0.0
        %1904 = vmatpush1.msra.mxu0 0.0
        %1905 = vmatprep.subr.mxu0 0.0
        %1906 = vmatpush1.msra.mxu0 0.0
        %1907 = vmatprep.subr.mxu0 0.0
        %1908 = vmatpush1.msra.mxu0 0.0
        %1909 = vmatprep.subr.mxu0 0.0
        %1910 = vmatpush1.msra.mxu0 0.0
        %1911 = vmatprep.subr.mxu0 0.0
        %1912 = vmatpush1.msra.mxu0 0.0
        %1913 = vmatprep.subr.mxu0 0.0
        %1914 = vmatpush1.msra.mxu0 0.0
        %1915 = vmatprep.subr.mxu0 0.0
        %1916 = vmatpush1.msra.mxu0 0.0
        %1917 = vmatprep.subr.mxu0 0.0
        %1918 = vmatpush1.msra.mxu0 0.0
        %1919 = vmatprep.subr.mxu0 0.0
        %1920 = vmatpush1.msra.mxu0 0.0
        %1921 = vmatprep.subr.mxu0 0.0
        %1922 = vmatpush1.msra.mxu0 0.0
        %1923 = vmatprep.subr.mxu0 0.0
        %1924 = vmatpush1.msra.mxu0 0.0
        %1925 = vmatprep.subr.mxu0 0.0
        %1926 = vmatpush1.msra.mxu0 0.0
        %1927 = vmatprep.subr.mxu0 0.0
        %1928 = vmatpush1.msra.mxu0 0.0
        %1929 = vmatprep.subr.mxu0 0.0
        %1930 = vmatpush1.msra.mxu0 0.0
        %1931 = vmatprep.subr.mxu0 0.0
        %1932 = vmatpush1.msra.mxu0 0.0
        %1933 = vmatprep.subr.mxu0 0.0
        %1934 = vmatpush1.msra.mxu0 0.0
        %1935 = vmatprep.subr.mxu0 0.0
        %1936 = vmatpush1.msra.mxu0 0.0
        %1937 = vmatprep.subr.mxu0 0.0
        %1938 = vmatpush1.msra.mxu0 0.0
        %1939 = vmatprep.mubr.f32.mxu0 0.0
        %1940 = vmatmul.mubr.f32.gmra.mrb[0].mxu0 %v1870
        %v1941 = vpop.f32.mrb[0].mxu0
        %v1942 = vadd.f32 0.0, %v1941
        %v1943 = vpop.f32.mrb[0].mxu0
        %1944 = vmatprep.mubr.f32.mxu0 0.0
        %1945 = vmatmul.mubr.f32.gmra.mrb[0].mxu0 %v1873
        %v1946 = vpop.f32.mrb[0].mxu0
        %v1947 = vadd.f32 0.0, %v1946
        %v1948 = vpop.f32.mrb[0].mxu0
        %1949 = vdwg.mxu0
        %v1950 = vadd.f32 %v1856, %v1942
        %v1951 = vadd.f32 %v1861, %v1947
        %v1952 = vmax.f32 %v1950, 0.0
        %v1953 = vmax.f32 %v1951, 0.0
        %1954 = vst [vmem:[#allocation2] sm:$0xff] %v1952
        %1955 = vst [vmem:[#allocation2 + $0x8] sm:$0xff] %v1953
        %v1956 = vld [vmem:[#allocation2] sm:$0xff]
        %v1957 = vld [vmem:[#allocation2 + $0x8] sm:$0xff]
        %v1958 = vld [vmem:[#allocation7] sm:$0xff]
        %v1959 = vld [vmem:[#allocation7 + $0x8] sm:$0xff]
        %v1960 = vld [vmem:[#allocation7 + $0x10] sm:$0xff]
        %v1961 = vld [vmem:[#allocation7 + $0x18] sm:$0xff]
        %v1962 = vld [vmem:[#allocation7 + $0x20] sm:$0xff]
        %v1963 = vld [vmem:[#allocation7 + $0x28] sm:$0xff]
        %v1964 = vld [vmem:[#allocation7 + $0x30] sm:$0xff]
        %v1965 = vld [vmem:[#allocation7 + $0x38] sm:$0xff]
        %v1966 = vld [vmem:[#allocation7 + $0x40] sm:$0xff]
        %v1967 = vld [vmem:[#allocation7 + $0x48] sm:$0xff]
        %v1968 = vld [vmem:[#allocation7 + $0x50] sm:$0xff]
        %v1969 = vld [vmem:[#allocation7 + $0x58] sm:$0xff]
        %v1970 = vld [vmem:[#allocation7 + $0x60] sm:$0xff]
        %v1971 = vld [vmem:[#allocation7 + $0x68] sm:$0xff]
        %v1972 = vld [vmem:[#allocation7 + $0x70] sm:$0xff]
        %v1973 = vld [vmem:[#allocation7 + $0x78] sm:$0xff]
        %1974 = vmatprep.subr.mxu0 0.0
        %1975 = vmatpush1.msra.mxu0 %v1958
        %1976 = vmatprep.subr.mxu0 0.0
        %1977 = vmatpush1.msra.mxu0 %v1959
        %1978 = vmatprep.subr.mxu0 0.0
        %1979 = vmatpush1.msra.mxu0 %v1960
        %1980 = vmatprep.subr.mxu0 0.0
        %1981 = vmatpush1.msra.mxu0 %v1961
        %1982 = vmatprep.subr.mxu0 0.0
        %1983 = vmatpush1.msra.mxu0 %v1962
        %1984 = vmatprep.subr.mxu0 0.0
        %1985 = vmatpush1.msra.mxu0 %v1963
        %1986 = vmatprep.subr.mxu0 0.0
        %1987 = vmatpush1.msra.mxu0 %v1964
        %1988 = vmatprep.subr.mxu0 0.0
        %1989 = vmatpush1.msra.mxu0 %v1965
        %1990 = vmatprep.subr.mxu0 0.0
        %1991 = vmatpush1.msra.mxu0 %v1966
        %1992 = vmatprep.subr.mxu0 0.0
        %1993 = vmatpush1.msra.mxu0 %v1967
        %1994 = vmatprep.subr.mxu0 0.0
        %1995 = vmatpush1.msra.mxu0 %v1968
        %1996 = vmatprep.subr.mxu0 0.0
        %1997 = vmatpush1.msra.mxu0 %v1969
        %1998 = vmatprep.subr.mxu0 0.0
        %1999 = vmatpush1.msra.mxu0 %v1970
        %2000 = vmatprep.subr.mxu0 0.0
        %2001 = vmatpush1.msra.mxu0 %v1971
        %2002 = vmatprep.subr.mxu0 0.0
        %2003 = vmatpush1.msra.mxu0 %v1972
        %2004 = vmatprep.subr.mxu0 0.0
        %2005 = vmatpush1.msra.mxu0 %v1973
        %2006 = vmatprep.subr.mxu0 0.0
        %2007 = vmatpush1.msra.mxu0 0.0
        %2008 = vmatprep.subr.mxu0 0.0
        %2009 = vmatpush1.msra.mxu0 0.0
        %2010 = vmatprep.subr.mxu0 0.0
        %2011 = vmatpush1.msra.mxu0 0.0
        %2012 = vmatprep.subr.mxu0 0.0
        %2013 = vmatpush1.msra.mxu0 0.0
        %2014 = vmatprep.subr.mxu0 0.0
        %2015 = vmatpush1.msra.mxu0 0.0
        %2016 = vmatprep.subr.mxu0 0.0
        %2017 = vmatpush1.msra.mxu0 0.0
        %2018 = vmatprep.subr.mxu0 0.0
        %2019 = vmatpush1.msra.mxu0 0.0
        %2020 = vmatprep.subr.mxu0 0.0
        %2021 = vmatpush1.msra.mxu0 0.0
        %2022 = vmatprep.subr.mxu0 0.0
        %2023 = vmatpush1.msra.mxu0 0.0
        %2024 = vmatprep.subr.mxu0 0.0
        %2025 = vmatpush1.msra.mxu0 0.0
        %2026 = vmatprep.subr.mxu0 0.0
        %2027 = vmatpush1.msra.mxu0 0.0
        %2028 = vmatprep.subr.mxu0 0.0
        %2029 = vmatpush1.msra.mxu0 0.0
        %2030 = vmatprep.subr.mxu0 0.0
        %2031 = vmatpush1.msra.mxu0 0.0
        %2032 = vmatprep.subr.mxu0 0.0
        %2033 = vmatpush1.msra.mxu0 0.0
        %2034 = vmatprep.subr.mxu0 0.0
        %2035 = vmatpush1.msra.mxu0 0.0
        %2036 = vmatprep.subr.mxu0 0.0
        %2037 = vmatpush1.msra.mxu0 0.0
        %2038 = vmatprep.mubr.f32.mxu0 0.0
        %2039 = vmatmul.mubr.f32.gmra.mrb[0].mxu0 %v1956
        %v2040 = vpop.f32.mrb[0].mxu0
        %v2041 = vadd.f32 %v648, %v2040
        %v2042 = vpop.f32.mrb[0].mxu0
        %2043 = vmatprep.mubr.f32.mxu0 0.0
        %2044 = vmatmul.mubr.f32.gmra.mrb[0].mxu0 %v1957
        %v2045 = vpop.f32.mrb[0].mxu0
        %v2046 = vadd.f32 %v654, %v2045
        %v2047 = vpop.f32.mrb[0].mxu0
        %2048 = vdwg.mxu0
        %v2049 = vld [vmem:[%s11] sm:$0x1]
        %v2051 = vlaneseq
        %v2052 = vshrl.u32 %v2051, 7
        %v2053 = vsub.s32 0, %v2052
        %v2054 = vrot.slane %v2049, %v2053
        %v2056 = vadd.f32 %v2041, %v2054
        %v2057 = vadd.f32 %v2046, %v2054
        %v2058 = vmax.f32 %v2056, 0.0
        %v2059 = vmax.f32 %v2057, 0.0
        %v2060 = vld [vmem:[#allocation8] sm:$0xff]
        %v2061 = vld [vmem:[#allocation8 + $0x8] sm:$0xff]
        %v2062 = vld [vmem:[#allocation8 + $0x10] sm:$0xff]
        %v2063 = vld [vmem:[#allocation8 + $0x18] sm:$0xff]
        %v2064 = vld [vmem:[#allocation8 + $0x20] sm:$0xff]
        %v2065 = vld [vmem:[#allocation8 + $0x28] sm:$0xff]
        %v2066 = vld [vmem:[#allocation8 + $0x30] sm:$0xff]
        %v2067 = vld [vmem:[#allocation8 + $0x38] sm:$0xff]
        %v2068 = vld [vmem:[#allocation8 + $0x40] sm:$0xff]
        %v2069 = vld [vmem:[#allocation8 + $0x48] sm:$0xff]
        %v2070 = vld [vmem:[#allocation8 + $0x50] sm:$0xff]
        %v2071 = vld [vmem:[#allocation8 + $0x58] sm:$0xff]
        %v2072 = vld [vmem:[#allocation8 + $0x60] sm:$0xff]
        %v2073 = vld [vmem:[#allocation8 + $0x68] sm:$0xff]
        %v2074 = vld [vmem:[#allocation8 + $0x70] sm:$0xff]
        %v2075 = vld [vmem:[#allocation8 + $0x78] sm:$0xff]
        %2076 = vmatprep.subr.mxu0 0.0
        %2077 = vmatpush1.msra.mxu0 %v2060
        %2078 = vmatprep.subr.mxu0 0.0
        %2079 = vmatpush1.msra.mxu0 %v2061
        %2080 = vmatprep.subr.mxu0 0.0
        %2081 = vmatpush1.msra.mxu0 %v2062
        %2082 = vmatprep.subr.mxu0 0.0
        %2083 = vmatpush1.msra.mxu0 %v2063
        %2084 = vmatprep.subr.mxu0 0.0
        %2085 = vmatpush1.msra.mxu0 %v2064
        %2086 = vmatprep.subr.mxu0 0.0
        %2087 = vmatpush1.msra.mxu0 %v2065
        %2088 = vmatprep.subr.mxu0 0.0
        %2089 = vmatpush1.msra.mxu0 %v2066
        %2090 = vmatprep.subr.mxu0 0.0
        %2091 = vmatpush1.msra.mxu0 %v2067
        %2092 = vmatprep.subr.mxu0 0.0
        %2093 = vmatpush1.msra.mxu0 %v2068
        %2094 = vmatprep.subr.mxu0 0.0
        %2095 = vmatpush1.msra.mxu0 %v2069
        %2096 = vmatprep.subr.mxu0 0.0
        %2097 = vmatpush1.msra.mxu0 %v2070
        %2098 = vmatprep.subr.mxu0 0.0
        %2099 = vmatpush1.msra.mxu0 %v2071
        %2100 = vmatprep.subr.mxu0 0.0
        %2101 = vmatpush1.msra.mxu0 %v2072
        %2102 = vmatprep.subr.mxu0 0.0
        %2103 = vmatpush1.msra.mxu0 %v2073
        %2104 = vmatprep.subr.mxu0 0.0
        %2105 = vmatpush1.msra.mxu0 %v2074
        %2106 = vmatprep.subr.mxu0 0.0
        %2107 = vmatpush1.msra.mxu0 %v2075
        %2108 = vmatprep.subr.mxu0 0.0
        %2109 = vmatpush1.msra.mxu0 0.0
        %2110 = vmatprep.subr.mxu0 0.0
        %2111 = vmatpush1.msra.mxu0 0.0
        %2112 = vmatprep.subr.mxu0 0.0
        %2113 = vmatpush1.msra.mxu0 0.0
        %2114 = vmatprep.subr.mxu0 0.0
        %2115 = vmatpush1.msra.mxu0 0.0
        %2116 = vmatprep.subr.mxu0 0.0
        %2117 = vmatpush1.msra.mxu0 0.0
        %2118 = vmatprep.subr.mxu0 0.0
        %2119 = vmatpush1.msra.mxu0 0.0
        %2120 = vmatprep.subr.mxu0 0.0
        %2121 = vmatpush1.msra.mxu0 0.0
        %2122 = vmatprep.subr.mxu0 0.0
        %2123 = vmatpush1.msra.mxu0 0.0
        %2124 = vmatprep.subr.mxu0 0.0
        %2125 = vmatpush1.msra.mxu0 0.0
        %2126 = vmatprep.subr.mxu0 0.0
        %2127 = vmatpush1.msra.mxu0 0.0
        %2128 = vmatprep.subr.mxu0 0.0
        %2129 = vmatpush1.msra.mxu0 0.0
        %2130 = vmatprep.subr.mxu0 0.0
        %2131 = vmatpush1.msra.mxu0 0.0
        %2132 = vmatprep.subr.mxu0 0.0
        %2133 = vmatpush1.msra.mxu0 0.0
        %2134 = vmatprep.subr.mxu0 0.0
        %2135 = vmatpush1.msra.mxu0 0.0
        %2136 = vmatprep.subr.mxu0 0.0
        %2137 = vmatpush1.msra.mxu0 0.0
        %2138 = vmatprep.subr.mxu0 0.0
        %2139 = vmatpush1.msra.mxu0 0.0
        %2140 = vmatprep.mubr.f32.mxu0 0.0
        %2141 = vmatmul.mubr.f32.gmra.mrb[0].mxu0 %v2058
        %v2142 = vpop.f32.mrb[0].mxu0
        %v2143 = vadd.f32 0.0, %v2142
        %v2144 = vpop.f32.mrb[0].mxu0
        %2145 = vmatprep.mubr.f32.mxu0 0.0
        %2146 = vmatmul.mubr.f32.gmra.mrb[0].mxu0 %v2059
        %v2147 = vpop.f32.mrb[0].mxu0
        %v2148 = vadd.f32 0.0, %v2147
        %v2149 = vpop.f32.mrb[0].mxu0
        %2150 = vdwg.mxu0
        %v2151 = vmul.f32 %v2058, %v2058
        %v2152 = vmul.f32 %v2059, %v2059
        %2153 = vmatprep.subr.mxu0 0.0
        %2154 = vmatpush1.msra.mxu0 %v2060
        %2155 = vmatprep.subr.mxu0 0.0
        %2156 = vmatpush1.msra.mxu0 %v2061
        %2157 = vmatprep.subr.mxu0 0.0
        %2158 = vmatpush1.msra.mxu0 %v2062
        %2159 = vmatprep.subr.mxu0 0.0
        %2160 = vmatpush1.msra.mxu0 %v2063
        %2161 = vmatprep.subr.mxu0 0.0
        %2162 = vmatpush1.msra.mxu0 %v2064
        %2163 = vmatprep.subr.mxu0 0.0
        %2164 = vmatpush1.msra.mxu0 %v2065
        %2165 = vmatprep.subr.mxu0 0.0
        %2166 = vmatpush1.msra.mxu0 %v2066
        %2167 = vmatprep.subr.mxu0 0.0
        %2168 = vmatpush1.msra.mxu0 %v2067
        %2169 = vmatprep.subr.mxu0 0.0
        %2170 = vmatpush1.msra.mxu0 %v2068
        %2171 = vmatprep.subr.mxu0 0.0
        %2172 = vmatpush1.msra.mxu0 %v2069
        %2173 = vmatprep.subr.mxu0 0.0
        %2174 = vmatpush1.msra.mxu0 %v2070
        %2175 = vmatprep.subr.mxu0 0.0
        %2176 = vmatpush1.msra.mxu0 %v2071
        %2177 = vmatprep.subr.mxu0 0.0
        %2178 = vmatpush1.msra.mxu0 %v2072
        %2179 = vmatprep.subr.mxu0 0.0
        %2180 = vmatpush1.msra.mxu0 %v2073
        %2181 = vmatprep.subr.mxu0 0.0
        %2182 = vmatpush1.msra.mxu0 %v2074
        %2183 = vmatprep.subr.mxu0 0.0
        %2184 = vmatpush1.msra.mxu0 %v2075
        %2185 = vmatprep.subr.mxu0 0.0
        %2186 = vmatpush1.msra.mxu0 0.0
        %2187 = vmatprep.subr.mxu0 0.0
        %2188 = vmatpush1.msra.mxu0 0.0
        %2189 = vmatprep.subr.mxu0 0.0
        %2190 = vmatpush1.msra.mxu0 0.0
        %2191 = vmatprep.subr.mxu0 0.0
        %2192 = vmatpush1.msra.mxu0 0.0
        %2193 = vmatprep.subr.mxu0 0.0
        %2194 = vmatpush1.msra.mxu0 0.0
        %2195 = vmatprep.subr.mxu0 0.0
        %2196 = vmatpush1.msra.mxu0 0.0
        %2197 = vmatprep.subr.mxu0 0.0
        %2198 = vmatpush1.msra.mxu0 0.0
        %2199 = vmatprep.subr.mxu0 0.0
        %2200 = vmatpush1.msra.mxu0 0.0
        %2201 = vmatprep.subr.mxu0 0.0
        %2202 = vmatpush1.msra.mxu0 0.0
        %2203 = vmatprep.subr.mxu0 0.0
        %2204 = vmatpush1.msra.mxu0 0.0
        %2205 = vmatprep.subr.mxu0 0.0
        %2206 = vmatpush1.msra.mxu0 0.0
        %2207 = vmatprep.subr.mxu0 0.0
        %2208 = vmatpush1.msra.mxu0 0.0
        %2209 = vmatprep.subr.mxu0 0.0
        %2210 = vmatpush1.msra.mxu0 0.0
        %2211 = vmatprep.subr.mxu0 0.0
        %2212 = vmatpush1.msra.mxu0 0.0
        %2213 = vmatprep.subr.mxu0 0.0
        %2214 = vmatpush1.msra.mxu0 0.0
        %2215 = vmatprep.subr.mxu0 0.0
        %2216 = vmatpush1.msra.mxu0 0.0
        %2217 = vmatprep.mubr.f32.mxu0 0.0
        %2218 = vmatmul.mubr.f32.gmra.mrb[0].mxu0 %v2151
        %v2219 = vpop.f32.mrb[0].mxu0
        %v2220 = vadd.f32 0.0, %v2219
        %v2221 = vpop.f32.mrb[0].mxu0
        %2222 = vmatprep.mubr.f32.mxu0 0.0
        %2223 = vmatmul.mubr.f32.gmra.mrb[0].mxu0 %v2152
        %v2224 = vpop.f32.mrb[0].mxu0
        %v2225 = vadd.f32 0.0, %v2224
        %v2226 = vpop.f32.mrb[0].mxu0
        %2227 = vdwg.mxu0
        %v2228 = vmul.f32 %v2143, %v2143
        %v2229 = vmul.f32 %v2148, %v2148
        %v2230 = vsub.f32 %v2220, %v2228
        %v2231 = vsub.f32 %v2225, %v2229
        %v2232 = vmax.f32 %v2230, 0.0
        %v2233 = vmax.f32 %v2231, 0.0
        %v2234 = vsub.f32 %v2058, %v2143
        %v2235 = vsub.f32 %v2059, %v2148
        %v2236 = vadd.f32 %v2232, 1e-05
        %v2237 = vadd.f32 %v2233, 1e-05
        %v2238 = vrsqrt.pop %v2236
        %v2239 = vrsqrt.pop %v2237
        %v2240 = vmul.f32 %v2234, %v2238
        %v2241 = vmul.f32 %v2235, %v2239
        %v2242 = vld [vmem:[%s12] sm:$0x1]
        %v2244 = vlaneseq
        %v2245 = vshrl.u32 %v2244, 7
        %v2246 = vsub.s32 0, %v2245
        %v2247 = vrot.slane %v2242, %v2246
        %v2249 = vmul.f32 %v2240, %v2247
        %v2250 = vmul.f32 %v2241, %v2247
        %v2251 = vld [vmem:[%s13] sm:$0x1]
        %v2253 = vlaneseq
        %v2254 = vshrl.u32 %v2253, 7
        %v2255 = vsub.s32 0, %v2254
        %v2256 = vrot.slane %v2251, %v2255
        %v2258 = vadd.f32 %v2249, %v2256
        %v2259 = vadd.f32 %v2250, %v2256
        %2260 = vst [vmem:[%s551] sm:$0xff] %v2258
        %2261 = vst [vmem:[%s551 + $0x8] sm:$0xff] %v2259
        %p2262 = scmp.lt.s32.totalorder %s29, 1
        %s2263 = scalar_select %p2262, %s29, 1
        %s2264 = smul.addr %s2263, 2
        %s2265 = smul.addr %s2264, 8
        %s2266 = scalar_lea.vmem %s15, %s2265
        // Predicated region
        $region97: #{forward.1} parent=79 // pred_check
          %p2267 = pneg %p367
        $region98: #{forward.1} parent=79 // pred_check_branch
          %2269 = sbr.rel (%p2267) target = $region100
        $region99: #{forward.1} parent=79 // pred_region
          _
        $region100: #{forward.1} parent=79 // pred_fallthru
          _
      $region80: #{forward.1} parent=5 // pred_fallthru
        _
      %p2270 = scmp.le.s32.totalorder 2, %s24
      // Predicated region
      $region101: #{forward.1} parent=5 // pred_check
        %p2271 = pneg %p2270
      $region102: #{forward.1} parent=5 // pred_check_branch
        %2273 = sbr.rel (%p2271) target = $region104
      $region103: #{forward.1} parent=5 // pred_region
        %s2274 = ssub.s32 %s24, 2
        // Predicated region
        $region105: #{forward.1} parent=103 // pred_check
          %p2275 = pneg %p373
        $region106: #{forward.1} parent=103 // pred_check_branch
          %2277 = sbr.rel (%p2275) target = $region108
        $region107: #{forward.1} parent=103 // pred_region
          %p2278 = scmp.lt.s32.totalorder %s30, 1
          %s2279 = scalar_select %p2278, %s30, 1
          %s2280 = smul.addr %s2279, 2
          %s2281 = smul.addr %s2280, 8
          %s2282 = scalar_lea.vmem %s15, %s2281
        $region108: #{forward.1} parent=103 // pred_fallthru
          _
      $region104: #{forward.1} parent=5 // pred_fallthru
        _
    $region6: #{forward.1} parent=1 // loop_footer
      %s28 = sadd.s32 1, %s24
    $region7: #{forward.1} parent=1 // loop_footer_branch
      %23 = sbr.rel target = $region3
    $region8: #{forward.1} parent=1 // loop_exit
      _
    %2283 = vsyncpa [#allocation4], 1
    %s2284 = scalar_lea.sflag [#allocation4], 1
    %2285 = vsyncpa %s2284, 1
    %2286 = vsyncpa [#allocation6], 1
    %2287 = vsyncpa [#allocation9], 1

</llo_original>
